<compile_context>
chip_gen: v6e
topology: v6e:2x2x1
jax: 0.10.0
libtpu: 0.0.40
codegen_flags: <defaults>
</compile_context>

<pallas_src>
import functools

import jax
import jax.numpy as jnp
from jax.experimental import pallas as pl
from jax.experimental.pallas import tpu as pltpu

BN_EPS = 1e-5
BLOCKS = (3, 4, 6, 3)
PLANES = (64, 128, 256, 512)
EXPANSION = 4

# Scoped VMEM budget: well under v7x's 64 MiB physical VMEM, above v5e's 16 MiB
# default so 512-wide bf16 tiles keep full double-buffering on all chips.
VMEM_LIMIT_BYTES = 32 * 1024 * 1024


# ----------------------------- tiling helpers -------------------------------


def _round_up(x, m):
    return (x + m - 1) // m * m


def _row_tile(m, cap=512):
    """Row (M) tile: multiple of 16 (bf16 sublane packing), <= cap."""
    if m <= cap:
        tm = _round_up(m, 16)
        return tm, tm
    return cap, _round_up(m, cap)


def _col_tile(c, cap=512):
    """Channel tile: full width if small, otherwise a 128-multiple divisor."""
    if c <= cap:
        return c
    for cand in (cap, 256, 128):
        if cand <= cap and c % cand == 0:
            return cand
    return c


def _k_tile(k):
    """K (reduction) tile: full if small, else a 128-multiple divisor <= 512."""
    if k <= 1024:
        return k
    for cand in (512, 384, 256, 128):
        if k % cand == 0:
            return cand
    return k


# ----------------------------- Pallas kernels -------------------------------


def _matmul_stats_kernel(x_ref, w_ref, z_ref, stat_ref, acc_ref):
    """bf16 matmul with f32 VMEM accumulation.

    Emits z in bf16 plus one packed per-M-tile stats block: channel sum in
    sublanes 0-3, channel sum-of-squares in sublanes 4-7 (computed from the
    f32 accumulator, not the bf16 store).
    """
    k = pl.program_id(2)

    @pl.when(k == 0)
    def _init():
        acc_ref[...] = jnp.zeros_like(acc_ref)

    acc_ref[...] += jnp.dot(x_ref[...], w_ref[...],
                            preferred_element_type=jnp.float32)

    @pl.when(k == pl.num_programs(2) - 1)
    def _finalize():
        acc = acc_ref[...]
        z_ref[...] = acc.astype(z_ref.dtype)
        tn = acc.shape[1]
        s = jnp.sum(acc, axis=0, keepdims=True)
        sq = jnp.sum(acc * acc, axis=0, keepdims=True)
        stat_ref[...] = jnp.concatenate(
            [jnp.broadcast_to(s, (4, tn)), jnp.broadcast_to(sq, (4, tn))],
            axis=0)[None]


def _conv3x3_s1_kernel(x_ref, w_ref, z_ref, stat_ref, acc_ref, *, ho, wo):
    """Direct 3x3 / stride-1 / pad-1 conv on one padded image (no im2col).

    x_ref: (1, ho+2, wo+2, cin) bf16; w_ref: (9, cin, tcout) bf16.
    The 9 taps are static window views of the VMEM block, so the activation is
    fetched from HBM exactly once per (image, cout-tile).  Requires wo % 8 == 0
    so the (ho, wo, cin) -> (ho*wo, cin) flatten is layout-preserving.
    """
    cin = x_ref.shape[3]
    tcout = z_ref.shape[3]
    for t in range(9):
        di, dj = divmod(t, 3)
        xm = x_ref[0, di:di + ho, dj:dj + wo, :].reshape(ho * wo, cin)
        part = jnp.dot(xm, w_ref[t], preferred_element_type=jnp.float32)
        if t == 0:
            acc_ref[...] = part
        else:
            acc_ref[...] += part
    acc = acc_ref[...]
    z_ref[...] = acc.reshape(z_ref.shape).astype(z_ref.dtype)
    s = jnp.sum(acc, axis=0, keepdims=True)
    sq = jnp.sum(acc * acc, axis=0, keepdims=True)
    stat_ref[...] = jnp.concatenate(
        [jnp.broadcast_to(s, (4, tcout)), jnp.broadcast_to(sq, (4, tcout))],
        axis=0)[None]


def _bn_act_kernel(z_ref, s_ref, b_ref, o_ref, *, relu):
    y = z_ref[...].astype(jnp.float32) * s_ref[...] + b_ref[...]
    if relu:
        y = jnp.maximum(y, 0.0)
    o_ref[...] = y.astype(o_ref.dtype)


def _bn_act_res_kernel(z_ref, s_ref, b_ref, r_ref, o_ref):
    y = (z_ref[...].astype(jnp.float32) * s_ref[...] + b_ref[...]
         + r_ref[...].astype(jnp.float32))
    o_ref[...] = jnp.maximum(y, 0.0).astype(o_ref.dtype)


def _bn_act_res_bn_kernel(z_ref, s_ref, b_ref, zd_ref, sd_ref, bd_ref, o_ref):
    y = (z_ref[...].astype(jnp.float32) * s_ref[...] + b_ref[...]
         + zd_ref[...].astype(jnp.float32) * sd_ref[...] + bd_ref[...])
    o_ref[...] = jnp.maximum(y, 0.0).astype(o_ref.dtype)


def _max9_kernel(t0, t1, t2, t3, t4, t5, t6, t7, t8, o_ref):
    m1 = jnp.maximum(jnp.maximum(t0[...], t1[...]), jnp.maximum(t2[...], t3[...]))
    m2 = jnp.maximum(jnp.maximum(t4[...], t5[...]), jnp.maximum(t6[...], t7[...]))
    o_ref[...] = jnp.maximum(jnp.maximum(m1, m2), t8[...])


def _avgpool_kernel(x_ref, o_ref):
    # x_ref: (1, HW, tc) bf16 -> o_ref: (1, 1, tc) f32 (global average pool)
    o_ref[...] = jnp.mean(x_ref[0].astype(jnp.float32), axis=0, keepdims=True)[None]


def _linear_kernel(x_ref, w_ref, b_ref, o_ref):
    o_ref[...] = (jnp.dot(x_ref[...], w_ref[...],
                          preferred_element_type=jnp.float32) + b_ref[...])


# ----------------------------- kernel wrappers -------------------------------


def _matmul_stats(x2d, w):
    """x2d: (M, K) bf16, w: (K, Cout) bf16 -> (z (M_pad, Cout) bf16, sum, sumsq f32)."""
    m, k = x2d.shape
    cout = w.shape[1]
    tm, m_pad = _row_tile(m, cap=512)
    gm = m_pad // tm
    # v7x has two TensorCores: keep >= 2 parallel output tiles where possible.
    n_cap = 512 if (gm >= 2 or cout < 256) else min(512, cout // 2)
    tn = _col_tile(cout, cap=n_cap)
    gn = cout // tn
    if gm * gn == 1 and tm >= 32:
        tm = _round_up(tm // 2, 16)
        m_pad = _round_up(m, tm)
        gm = m_pad // tm
    tk = _k_tile(k)
    gk = max(1, k // tk)
    if m_pad != m:
        x2d = jnp.pad(x2d, ((0, m_pad - m), (0, 0)))

    # NOTE: if the K-axis DMA shows up exposed in profiles, a deeper weight
    # prefetch (pipeline_mode=pl.Buffered(3) on the w BlockSpec) is the next lever.
    z, stats = pl.pallas_call(
        _matmul_stats_kernel,
        grid=(gm, gn, gk),
        in_specs=[
            pl.BlockSpec((tm, tk), lambda i, j, kk: (i, kk)),
            pl.BlockSpec((tk, tn), lambda i, j, kk: (kk, j)),
        ],
        out_specs=[
            pl.BlockSpec((tm, tn), lambda i, j, kk: (i, j)),
            pl.BlockSpec((1, 8, tn), lambda i, j, kk: (i, 0, j)),
        ],
        out_shape=[
            jax.ShapeDtypeStruct((m_pad, cout), jnp.bfloat16),
            jax.ShapeDtypeStruct((gm, 8, cout), jnp.float32),
        ],
        scratch_shapes=[pltpu.VMEM((tm, tn), jnp.float32)],
        compiler_params=pltpu.CompilerParams(
            dimension_semantics=("parallel", "parallel", "arbitrary"),
            vmem_limit_bytes=VMEM_LIMIT_BYTES),
        cost_estimate=pl.CostEstimate(
            flops=2 * m_pad * k * cout,
            transcendentals=0,
            bytes_accessed=(m_pad * k + k * cout + m_pad * cout) * 2),
    )(x2d, w)
    col_sum = jnp.sum(stats[:, 0, :], axis=0)
    col_sq = jnp.sum(stats[:, 4, :], axis=0)
    return z, col_sum, col_sq


def _bn_scale_shift(col_sum, col_sq, m_real, gamma, beta):
    # Train-mode BN: biased batch variance, eps=1e-5 (matches torch forward).
    # TODO(synk): E[z^2]-mean^2 in f32 can cancel for large means; Welford would be safer.
    mean = col_sum / m_real
    var = jnp.maximum(col_sq / m_real - mean * mean, 0.0)
    inv = jax.lax.rsqrt(var + BN_EPS)
    scale = gamma * inv
    shift = beta - mean * scale
    return scale.reshape(1, -1), shift.reshape(1, -1)


def _bn_apply(z, scale, shift, *, relu=True, residual=None,
              res_scale=None, res_shift=None):
    """Gridded BN apply (+ optional fused residual / downsample-BN + ReLU), bf16 out."""
    m, c = z.shape
    tm, m_pad = _row_tile(m, cap=512)
    gm = m_pad // tm
    tc_cap = 512 if (gm >= 2 or c < 256) else min(512, c // 2)
    tc = _col_tile(c, cap=tc_cap)
    gc = c // tc
    if gm * gc == 1 and tm >= 32:
        tm = _round_up(tm // 2, 16)
        m_pad = _round_up(m, tm)
        gm = m_pad // tm
    if m_pad != m:
        z = jnp.pad(z, ((0, m_pad - m), (0, 0)))
        if residual is not None:
            residual = jnp.pad(residual, ((0, m_pad - m), (0, 0)))

    row_spec = pl.BlockSpec((tm, tc), lambda i, j: (i, j))
    vec_spec = pl.BlockSpec((1, tc), lambda i, j: (0, j))

    if residual is None:
        kernel = functools.partial(_bn_act_kernel, relu=relu)
        args = (z, scale, shift)
        in_specs = [row_spec, vec_spec, vec_spec]
    elif res_scale is None:
        kernel = _bn_act_res_kernel
        args = (z, scale, shift, residual)
        in_specs = [row_spec, vec_spec, vec_spec, row_spec]
    else:
        kernel = _bn_act_res_bn_kernel
        args = (z, scale, shift, residual, res_scale, res_shift)
        in_specs = [row_spec, vec_spec, vec_spec, row_spec, vec_spec, vec_spec]

    return pl.pallas_call(
        kernel,
        grid=(gm, gc),
        in_specs=in_specs,
        out_specs=row_spec,
        out_shape=jax.ShapeDtypeStruct((m_pad, c), jnp.bfloat16),
        compiler_params=pltpu.CompilerParams(
            dimension_semantics=("parallel", "parallel")),
    )(*args)


def _conv_im2col_stats(x, unit, *, kh, kw, stride, pad):
    """im2col + tiled matmul path.

    Used for 1x1 convs (direct matmul, no duplication), the 7x7 stem (Cin=3, tiny
    duplication) and the three stride-2 3x3 convs / wo%8!=0 maps.
    """
    n = x.shape[0]
    cin = x.shape[3]
    cout = unit["w"].shape[1]
    xb = x.astype(jnp.bfloat16)
    if kh == 1 and kw == 1:
        if stride > 1:
            xb = xb[:, ::stride, ::stride, :]
        ho, wo = xb.shape[1], xb.shape[2]
        cols = xb.reshape(n * ho * wo, cin)
    else:
        if pad:
            xb = jnp.pad(xb, ((0, 0), (pad, pad), (pad, pad), (0, 0)))
        hp, wp = xb.shape[1], xb.shape[2]
        ho = (hp - kh) // stride + 1
        wo = (wp - kw) // stride + 1
        taps = [
            xb[:, i:i + stride * ho:stride, j:j + stride * wo:stride, :]
            for i in range(kh) for j in range(kw)
        ]
        cols = jnp.concatenate(taps, axis=-1).reshape(n * ho * wo, kh * kw * cin)
    m_real = n * ho * wo
    wmat = unit["w"].astype(jnp.bfloat16)
    z, col_sum, col_sq = _matmul_stats(cols, wmat)
    scale, shift = _bn_scale_shift(col_sum, col_sq, m_real, unit["gamma"], unit["beta"])
    return z, scale, shift, (n, ho, wo, cout), m_real


def _conv3x3_s1_stats(x, unit):
    """Direct spatial 3x3 stride-1 pad-1 conv: activation read from HBM once."""
    n, h, w_sp, cin = x.shape
    cout = unit["w"].shape[1]
    ho, wo = h, w_sp
    xb = jnp.pad(x.astype(jnp.bfloat16), ((0, 0), (1, 1), (1, 1), (0, 0)))
    wmat = unit["w"].astype(jnp.bfloat16).reshape(9, cin, cout)
    tcout = _col_tile(cout, cap=512)
    gcout = cout // tcout
    kernel = functools.partial(_conv3x3_s1_kernel, ho=ho, wo=wo)
    z, stats = pl.pallas_call(
        kernel,
        grid=(n, gcout),
        in_specs=[
            pl.BlockSpec((1, ho + 2, wo + 2, cin), lambda i, j: (i, 0, 0, 0)),
            pl.BlockSpec((9, cin, tcout), lambda i, j: (0, 0, j)),
        ],
        out_specs=[
            pl.BlockSpec((1, ho, wo, tcout), lambda i, j: (i, 0, 0, j)),
            pl.BlockSpec((1, 8, tcout), lambda i, j: (i, 0, j)),
        ],
        out_shape=[
            jax.ShapeDtypeStruct((n, ho, wo, cout), jnp.bfloat16),
            jax.ShapeDtypeStruct((n, 8, cout), jnp.float32),
        ],
        scratch_shapes=[pltpu.VMEM((ho * wo, tcout), jnp.float32)],
        compiler_params=pltpu.CompilerParams(
            dimension_semantics=("parallel", "parallel"),
            vmem_limit_bytes=VMEM_LIMIT_BYTES),
        cost_estimate=pl.CostEstimate(
            flops=2 * n * ho * wo * 9 * cin * cout,
            transcendentals=0,
            bytes_accessed=(n * (ho + 2) * (wo + 2) * cin
                            + 9 * cin * cout + n * ho * wo * cout) * 2),
    )(xb, wmat)
    m_real = n * ho * wo
    col_sum = jnp.sum(stats[:, 0, :], axis=0)
    col_sq = jnp.sum(stats[:, 4, :], axis=0)
    scale, shift = _bn_scale_shift(col_sum, col_sq, m_real, unit["gamma"], unit["beta"])
    return z.reshape(m_real, cout), scale, shift, (n, ho, wo, cout), m_real


def conv_stats(x, unit, *, kh, kw, stride, pad):
    """Conv matmul + batch statistics. Returns (z 2-D, scale, shift, dims, m_real)."""
    if kh == 3 and kw == 3 and stride == 1 and pad == 1 and x.shape[2] % 8 == 0:
        try:
            return _conv3x3_s1_stats(x, unit)
        except Exception:
            # Conservative fallback: keep the network runnable if the direct
            # spatial conv path fails to lower on a given compiler version.
            pass
    return _conv_im2col_stats(x, unit, kh=kh, kw=kw, stride=stride, pad=pad)


def conv_bn(x, unit, *, kh, kw, stride, pad, relu=True):
    z, scale, shift, dims, m_real = conv_stats(x, unit, kh=kh, kw=kw,
                                               stride=stride, pad=pad)
    y = _bn_apply(z, scale, shift, relu=relu)
    return y[:m_real].reshape(dims)


def maxpool_3x3_s2_p1(x):
    # TODO(synk): the 9 strided taps are still materialized by XLA before the
    # kernel; a fully in-kernel window gather would cut the remaining pool traffic.
    n, h, w, c = x.shape
    xp = jnp.pad(x, ((0, 0), (1, 1), (1, 1), (0, 0)), constant_values=-jnp.inf)
    ho = (h + 2 - 3) // 2 + 1
    wo = (w + 2 - 3) // 2 + 1
    m = n * ho * wo
    taps = [
        xp[:, i:i + 2 * ho:2, j:j + 2 * wo:2, :].reshape(m, c)
        for i in range(3) for j in range(3)
    ]
    tm, m_pad = _row_tile(m, cap=256)
    if m_pad != m:
        taps = [jnp.pad(t, ((0, m_pad - m), (0, 0))) for t in taps]
    tc = _col_tile(c, cap=512)
    gm, gc = m_pad // tm, c // tc
    spec = pl.BlockSpec((tm, tc), lambda i, j: (i, j))
    out = pl.pallas_call(
        _max9_kernel,
        grid=(gm, gc),
        in_specs=[spec] * 9,
        out_specs=spec,
        out_shape=jax.ShapeDtypeStruct((m_pad, c), x.dtype),
        compiler_params=pltpu.CompilerParams(
            dimension_semantics=("parallel", "parallel")),
    )(*taps)
    return out[:m].reshape(n, ho, wo, c)


def global_avgpool(x):
    n, h, w, c = x.shape
    hw = h * w
    tc = _col_tile(c, cap=512)
    gc = c // tc
    out = pl.pallas_call(
        _avgpool_kernel,
        grid=(n, gc),
        in_specs=[pl.BlockSpec((1, hw, tc), lambda i, j: (i, 0, j))],
        out_specs=pl.BlockSpec((1, 1, tc), lambda i, j: (i, 0, j)),
        out_shape=jax.ShapeDtypeStruct((n, 1, c), jnp.float32),
        compiler_params=pltpu.CompilerParams(
            dimension_semantics=("parallel", "parallel")),
    )(x.reshape(n, hw, c))
    return out.reshape(n, c)


def linear(x, w, b):
    m, k = x.shape
    nout = w.shape[1]
    tm, m_pad = _row_tile(m, cap=128)
    xb = x.astype(jnp.bfloat16)
    if m_pad != m:
        xb = jnp.pad(xb, ((0, m_pad - m), (0, 0)))
    gm = m_pad // tm
    out = pl.pallas_call(
        _linear_kernel,
        grid=(gm,),
        in_specs=[
            pl.BlockSpec((tm, k), lambda i: (i, 0)),
            pl.BlockSpec((k, nout), lambda i: (0, 0)),
            pl.BlockSpec((1, nout), lambda i: (0, 0)),
        ],
        out_specs=pl.BlockSpec((tm, nout), lambda i: (i, 0)),
        out_shape=jax.ShapeDtypeStruct((m_pad, nout), jnp.float32),
        compiler_params=pltpu.CompilerParams(
            dimension_semantics=("parallel",)),
    )(xb, w.astype(jnp.bfloat16), b.reshape(1, nout))
    return out[:m]


# ----------------------------- parameter init --------------------------------


def _conv_unit(key, kh, kw, cin, cout):
    # kaiming_normal_(mode='fan_out', nonlinearity='relu') as in torchvision resnet
    std = (2.0 / (kh * kw * cout)) ** 0.5
    w = std * jax.random.normal(key, (kh, kw, cin, cout), jnp.float32)
    return {
        "w": w.reshape(kh * kw * cin, cout),  # im2col/tap layout (i, j, cin) x cout
        "gamma": jnp.ones((cout,), jnp.float32),   # BN weight default
        "beta": jnp.zeros((cout,), jnp.float32),   # BN bias default
    }


def init_resnet50_params(key, num_classes):
    keys = iter(jax.random.split(key, 128))
    params = {"stem": _conv_unit(next(keys), 7, 7, 3, 64)}
    inplanes = 64
    layers = []
    for li, (planes, nblocks) in enumerate(zip(PLANES, BLOCKS)):
        layer_stride = 1 if li == 0 else 2
        blocks = []
        for bi in range(nblocks):
            s = layer_stride if bi == 0 else 1
            block = {
                "stride": s,
                "conv1": _conv_unit(next(keys), 1, 1, inplanes, planes),
                "conv2": _conv_unit(next(keys), 3, 3, planes, planes),
                "conv3": _conv_unit(next(keys), 1, 1, planes, planes * EXPANSION),
            }
            if s != 1 or inplanes != planes * EXPANSION:
                block["downsample"] = _conv_unit(next(keys), 1, 1, inplanes,
                                                 planes * EXPANSION)
            blocks.append(block)
            inplanes = planes * EXPANSION
        layers.append(blocks)
    params["layers"] = layers
    # fc: xavier_normal_ weight, zero bias (ResNet._init_weights)
    fan_in, fan_out = 512 * EXPANSION, num_classes
    std = (2.0 / (fan_in + fan_out)) ** 0.5
    params["fc_w"] = std * jax.random.normal(next(keys), (fan_in, num_classes),
                                             jnp.float32)
    params["fc_b"] = jnp.zeros((num_classes,), jnp.float32)
    return params


# ----------------------------- forward pass ----------------------------------


def bottleneck_forward(x, block):
    out = conv_bn(x, block["conv1"], kh=1, kw=1, stride=1, pad=0, relu=True)
    out = conv_bn(out, block["conv2"], kh=3, kw=3, stride=block["stride"], pad=1,
                  relu=True)
    z3, s3, b3, dims, m_real = conv_stats(out, block["conv3"], kh=1, kw=1,
                                          stride=1, pad=0)
    m_pad = z3.shape[0]
    if "downsample" in block:
        # Fully fused: relu(bn3(conv3) + bn_ds(downsample)) in one elementwise pass.
        zd, sd, bd, _, _ = conv_stats(x, block["downsample"], kh=1, kw=1,
                                      stride=block["stride"], pad=0)
        y = _bn_apply(z3, s3, b3, relu=True,
                      residual=zd, res_scale=sd, res_shift=bd)
    else:
        res = x.reshape(m_real, dims[3])
        if m_pad != m_real:
            res = jnp.pad(res, ((0, m_pad - m_real), (0, 0)))
        y = _bn_apply(z3, s3, b3, relu=True, residual=res)
    return y[:m_real].reshape(dims)


def resnet50_forward(params, x_nchw):
    # NCHW (PyTorch) -> NHWC (internal), bf16 activations between layers.
    x = jnp.transpose(x_nchw, (0, 2, 3, 1)).astype(jnp.bfloat16)
    x = conv_bn(x, params["stem"], kh=7, kw=7, stride=2, pad=3, relu=True)
    x = maxpool_3x3_s2_p1(x)
    for blocks in params["layers"]:
        for block in blocks:
            x = bottleneck_forward(x, block)
    x = global_avgpool(x)                                    # (N, 2048) f32
    return linear(x, params["fc_w"], params["fc_b"])         # (N, num_classes) f32


# TODO(synk): BatchNorm running-statistics updates (in-place buffer mutation in torch
# train mode) are omitted; they do not affect the forward output.

if __name__ == "__main__":
    output_size = 10
    key = jax.random.PRNGKey(0)
    pkey, xkey = jax.random.split(key)
    params = init_resnet50_params(pkey, output_size)
    x = jax.random.normal(xkey, (2, 3, 64, 64), jnp.float32)  # NCHW, like PyTorch
    out = resnet50_forward(params, x)
    out = jax.block_until_ready(out)
    assert out.shape == (2, output_size), out.shape
    assert bool(jnp.all(jnp.isfinite(out)))
    print("KERNEL_OK")
</pallas_src>

<mosaic_0001>
module attributes {stable_mosaic.version = 11 : i64} {
  func.func @_matmul_stats_kernel(%arg0: i32, %arg1: i32, %arg2: i32, %arg3: memref<512x147xbf16, #tpu.memory_space<vmem>>, %arg4: memref<147x64xbf16, #tpu.memory_space<vmem>>, %arg5: memref<512x64xbf16, #tpu.memory_space<vmem>>, %arg6: memref<1x8x64xf32, #tpu.memory_space<vmem>>, %arg7: memref<512x64xf32, #tpu.memory_space<vmem>>) attributes {dimension_semantics = [#tpu.dimension_semantics<parallel>, #tpu.dimension_semantics<parallel>, #tpu.dimension_semantics<arbitrary>], iteration_bounds = array<i64: 4, 1, 1>, scalar_prefetch = 0 : i64, scratch_operands = 1 : i64, tpu.core_type = #tpu.core_type<tc>, window_params = [{transform_indices = @transform_0, window_bounds = array<i64: 512, 147>}, {transform_indices = @transform_1, window_bounds = array<i64: 147, 64>}, {transform_indices = @transform_2, window_bounds = array<i64: 512, 64>}, {transform_indices = @transform_3, window_bounds = array<i64: 1, 8, 64>}]} {
    %c0_i32 = arith.constant 0 : i32
    %0 = arith.cmpi eq, %arg2, %c0_i32 : i32
    %1 = arith.extui %0 : i1 to i32
    %c0_i32_0 = arith.constant 0 : i32
    %2 = arith.cmpi ne, %1, %c0_i32_0 : i32
    scf.if %2 {
      %cst_10 = arith.constant 0.000000e+00 : f32
      %12 = vector.broadcast %cst_10 : f32 to vector<512x64xf32>
      %c0_11 = arith.constant 0 : index
      %c0_12 = arith.constant 0 : index
      %13 = vector.load %arg7[%c0_11, %c0_12] : memref<512x64xf32, #tpu.memory_space<vmem>>, vector<512x64xf32>
      tpu.vector_store %arg7[%c0_11, %c0_12], %12 {strides = array<i32>} : memref<512x64xf32, #tpu.memory_space<vmem>>, vector<512x64xf32>,
    } else {
    }
    %c0 = arith.constant 0 : index
    %c0_1 = arith.constant 0 : index
    %3 = vector.load %arg7[%c0, %c0_1] : memref<512x64xf32, #tpu.memory_space<vmem>>, vector<512x64xf32>
    %c0_2 = arith.constant 0 : index
    %c0_3 = arith.constant 0 : index
    %4 = vector.load %arg3[%c0_2, %c0_3] : memref<512x147xbf16, #tpu.memory_space<vmem>>, vector<512x147xbf16>
    %c0_4 = arith.constant 0 : index
    %c0_5 = arith.constant 0 : index
    %5 = vector.load %arg4[%c0_4, %c0_5] : memref<147x64xbf16, #tpu.memory_space<vmem>>, vector<147x64xbf16>
    %cst = arith.constant dense<0.000000e+00> : vector<512x64xf32>
    %6 = tpu.matmul %4, %5, %cst {dimension_numbers = #tpu.dot_dimension_numbers<[1], [0], [0], [1], [0, 0, 1, 1], [], []>} : vector<512x147xbf16>, vector<147x64xbf16>, vector<512x64xf32> -> vector<512x64xf32>
    %7 = arith.addf %3, %6 : vector<512x64xf32>
    %c0_6 = arith.constant 0 : index
    %c0_7 = arith.constant 0 : index
    %8 = vector.load %arg7[%c0_6, %c0_7] : memref<512x64xf32, #tpu.memory_space<vmem>>, vector<512x64xf32>
    tpu.vector_store %arg7[%c0_6, %c0_7], %7 {strides = array<i32>} : memref<512x64xf32, #tpu.memory_space<vmem>>, vector<512x64xf32>,
    %c0_i32_8 = arith.constant 0 : i32
    %9 = arith.cmpi eq, %arg2, %c0_i32_8 : i32
    %10 = arith.extui %9 : i1 to i32
    %c0_i32_9 = arith.constant 0 : i32
    %11 = arith.cmpi ne, %10, %c0_i32_9 : i32
    scf.if %11 {
      %c0_10 = arith.constant 0 : index
      %c0_11 = arith.constant 0 : index
      %12 = vector.load %arg7[%c0_10, %c0_11] : memref<512x64xf32, #tpu.memory_space<vmem>>, vector<512x64xf32>
      %13 = arith.truncf %12 : vector<512x64xf32> to vector<512x64xbf16>
      %c0_12 = arith.constant 0 : index
      %c0_13 = arith.constant 0 : index
      %14 = vector.load %arg5[%c0_12, %c0_13] : memref<512x64xbf16, #tpu.memory_space<vmem>>, vector<512x64xbf16>
      tpu.vector_store %arg5[%c0_12, %c0_13], %13 {strides = array<i32>} : memref<512x64xbf16, #tpu.memory_space<vmem>>, vector<512x64xbf16>,
      %cst_14 = arith.constant dense<0.000000e+00> : vector<64xf32>
      %15 = vector.multi_reduction <add>, %12, %cst_14 [0] : vector<512x64xf32> to vector<64xf32>
      %16 = vector.shape_cast %15 : vector<64xf32> to vector<1x64xf32>
      %17 = arith.mulf %12, %12 : vector<512x64xf32>
      %cst_15 = arith.constant dense<0.000000e+00> : vector<64xf32>
      %18 = vector.multi_reduction <add>, %17, %cst_15 [0] : vector<512x64xf32> to vector<64xf32>
      %19 = vector.shape_cast %18 : vector<64xf32> to vector<1x64xf32>
      %20 = vector.shape_cast %16 : vector<1x64xf32> to vector<1x64xf32>
      %21 = vector.broadcast %20 : vector<1x64xf32> to vector<4x64xf32>
      %22 = vector.shape_cast %19 : vector<1x64xf32> to vector<1x64xf32>
      %23 = vector.broadcast %22 : vector<1x64xf32> to vector<4x64xf32>
      %24 = tpu.concatenate %21, %23 in 0 : vector<4x64xf32>, vector<4x64xf32> -> vector<8x64xf32>
      %25 = vector.shape_cast %24 : vector<8x64xf32> to vector<1x8x64xf32>
      %c0_16 = arith.constant 0 : index
      %c0_17 = arith.constant 0 : index
      %c0_18 = arith.constant 0 : index
      %26 = vector.load %arg6[%c0_16, %c0_17, %c0_18] : memref<1x8x64xf32, #tpu.memory_space<vmem>>, vector<1x8x64xf32>
      tpu.vector_store %arg6[%c0_16, %c0_17, %c0_18], %25 {strides = array<i32>} : memref<1x8x64xf32, #tpu.memory_space<vmem>>, vector<1x8x64xf32>,
    } else {
    }
    return
  }
  func.func @transform_0(%arg0: i32, %arg1: i32, %arg2: i32) -> (i32, i32) {
    %c0_i32 = arith.constant 0 : i32
    return %arg0, %arg2 : i32, i32
  }
  func.func @transform_1(%arg0: i32, %arg1: i32, %arg2: i32) -> (i32, i32) {
    %c0_i32 = arith.constant 0 : i32
    return %arg2, %arg1 : i32, i32
  }
  func.func @transform_2(%arg0: i32, %arg1: i32, %arg2: i32) -> (i32, i32) {
    %c0_i32 = arith.constant 0 : i32
    return %arg0, %arg1 : i32, i32
  }
  func.func @transform_3(%arg0: i32, %arg1: i32, %arg2: i32) -> (i32, i32, i32) {
    %c0_i32 = arith.constant 0 : i32
    %c0_i32_0 = arith.constant 0 : i32
    return %arg0, %c0_i32, %arg1 : i32, i32, i32
  }
}

</mosaic_0001>

<llo_original>
// kernel: tpu_custom_call.1
$region0: #{tpu_custom_call.1}
  #allocation0 [shape = 'u32[]', space=smem, size = 0x4, offset = 0x4, fixed_abs, tag = 'smem constant byte address 0x4 - core index']
  #allocation1 [shape = 'u32[144,128]{1,0:T(1,128)}', space=vmem, size = 0x12000, scoped, tag = 'internal scratch']
  #allocation2 [shape = 'f32[512,64]{1,0:T(8,128)}', space=vmem, size = 0x40000, scoped, tag = 'scratch operand']
  %s0 = inlined_call_operand.vmem [shape: bf16[2048,147], index: 0, kind: input, shape index: {}]
  %s1 = inlined_call_operand.vmem [shape: bf16[147,64], index: 1, kind: input, shape index: {}]
  %s2 = inlined_call_operand.vmem [shape: bf16[2048,64], index: 2, kind: output, shape index: {0}]
  %s3 = inlined_call_operand.hbm [shape: f32[4,8,64], index: 3, kind: output, shape index: {1}]
  %4 = xla_tuple %s2, %s3
  %s5 = sld [smem:[#allocation0]]
  $region57: #{tpu_custom_call.1} parent=0
    _
  %s7 = ssub.s32 1, %s5
  %s8 = scalar_select 0, %s7, %s5
  $region1: #{tpu_custom_call.1} parent=0
    #allocation3 [shape = 'u8[8192]{0}', space=vmem, size = 0x2000, scoped, tag = 'output window, operand 1']
    #allocation4 [shape = 's32[2]{0}', space=sflag, size = 0x8, scoped, tag = 'scoped memory for tpu_custom_call.1']
    %9 = vsyncpa [#allocation4], 0
    %s10 = scalar_lea.sflag [#allocation4], 1
    %11 = vsyncpa %s10, 0
    loop: start=0, step=1, limit=6
    $region2: #{tpu_custom_call.1} parent=1 // loop_pre_header
      _
    $region3: #{tpu_custom_call.1} parent=1 // loop_header
      %s13 = sphi 0, %s17
      %p14 = scmp.ge.s32.totalorder %s13, 6
      %s20 = sphi 0, %s39
      %s21 = sphi 0, %s35
      %s22 = sphi 0, %s31
      %s23 = sphi 0, %s20
      %s24 = sphi 0, %s21
      %s25 = sphi 0, %s22
      %s26 = sphi 0, %s23
      %s27 = sphi 0, %s24
      %s28 = sphi 0, %s25
      %s44 = sphi 0, %s46
      %s47 = sphi 0, %s44
      %s48 = sphi 0, %s47
      %s64 = sphi 0, %s48
      %s72 = sphi 0, %s74
      %s75 = sphi 0, %s72
      %s76 = sphi 0, %s75
      %s92 = sphi 0, %s76
      %s100 = sphi 0, %s102
      %s103 = sphi 0, %s100
      %s104 = sphi 0, %s103
      %s120 = sphi 0, %s104
      %s128 = sphi 0, %s130
      %s131 = sphi 0, %s128
      %s132 = sphi 0, %s131
      %s148 = sphi 0, %s132
    $region4: #{tpu_custom_call.1} parent=1 // loop_header_branch
      %16 = sbr.rel (%p14) target = $region8
    $region5: #{tpu_custom_call.1} parent=1 // loop_body
      %s18 = ssub.s32 %s13, 1
      %s19 = ssub.s32 %s13, 2
      %s29 = sadd.s32 1, %s22
      %p30 = scmp.ge.s32.totalorder %s29, 1
      %s31 = scalar_select %p30, 0, %s29
      %s32 = sadd.s32 1, %s21
      %s33 = scalar_select %p30, %s32, %s21
      %p34 = scmp.ge.s32.totalorder %s33, 1
      %s35 = scalar_select %p34, 0, %s33
      %s36 = sadd.s32 1, %s20
      %s37 = scalar_select %p34, %s36, %s20
      %p38 = scmp.ge.s32.totalorder %s37, 4
      %s39 = scalar_select %p38, 0, %s37
      %s40 = ssub.s32 %s20, %s39
      %s41 = ssub.s32 %s22, %s31
      %s42 = sor.u32 %s40, %s41
      %p43 = scmp.eq.s32.totalorder %s42, 0
      %s45 = sadd.s32 %s44, 1
      %s46 = scalar_select %p43, %s44, %s45
      %p49 = pneg %p43
      %p50 = scmp.eq.s32.totalorder %s13, 3
      %p51 = por %p49, %p50
      %p52 = scmp.ne.s32.totalorder %s44, %s47
      %p53 = scmp.eq.s32.totalorder %s13, 0
      %p54 = por %p52, %p53
      %p55 = scmp.ne.s32.totalorder %s44, %s47
      %p56 = scmp.eq.s32.totalorder %s18, 3
      %p57 = por %p55, %p56
      %p58 = scmp.ne.s32.totalorder %s47, %s48
      %p59 = scmp.eq.s32.totalorder %s18, 0
      %p60 = por %p58, %p59
      %p61 = scmp.ne.s32.totalorder %s47, %s48
      %p62 = scmp.eq.s32.totalorder %s19, 3
      %p63 = por %p61, %p62
      %p65 = scmp.ne.s32.totalorder %s48, %s64
      %p66 = scmp.eq.s32.totalorder %s19, 0
      %p67 = por %p65, %p66
      %s68 = ssub.s32 %s22, %s31
      %s69 = ssub.s32 %s21, %s35
      %s70 = sor.u32 %s68, %s69
      %p71 = scmp.eq.s32.totalorder %s70, 0
      %s73 = sadd.s32 %s72, 1
      %s74 = scalar_select %p71, %s72, %s73
      %p77 = pneg %p71
      %p78 = scmp.eq.s32.totalorder %s13, 3
      %p79 = por %p77, %p78
      %p80 = scmp.ne.s32.totalorder %s72, %s75
      %p81 = scmp.eq.s32.totalorder %s13, 0
      %p82 = por %p80, %p81
      %p83 = scmp.ne.s32.totalorder %s72, %s75
      %p84 = scmp.eq.s32.totalorder %s18, 3
      %p85 = por %p83, %p84
      %p86 = scmp.ne.s32.totalorder %s75, %s76
      %p87 = scmp.eq.s32.totalorder %s18, 0
      %p88 = por %p86, %p87
      %p89 = scmp.ne.s32.totalorder %s75, %s76
      %p90 = scmp.eq.s32.totalorder %s19, 3
      %p91 = por %p89, %p90
      %p93 = scmp.ne.s32.totalorder %s76, %s92
      %p94 = scmp.eq.s32.totalorder %s19, 0
      %p95 = por %p93, %p94
      %s96 = ssub.s32 %s20, %s39
      %s97 = ssub.s32 %s21, %s35
      %s98 = sor.u32 %s96, %s97
      %p99 = scmp.eq.s32.totalorder %s98, 0
      %s101 = sadd.s32 %s100, 1
      %s102 = scalar_select %p99, %s100, %s101
      %p105 = pneg %p99
      %p106 = scmp.eq.s32.totalorder %s13, 3
      %p107 = por %p105, %p106
      %p108 = scmp.ne.s32.totalorder %s100, %s103
      %p109 = scmp.eq.s32.totalorder %s13, 0
      %p110 = por %p108, %p109
      %p111 = scmp.ne.s32.totalorder %s100, %s103
      %p112 = scmp.eq.s32.totalorder %s18, 3
      %p113 = por %p111, %p112
      %p114 = scmp.ne.s32.totalorder %s103, %s104
      %p115 = scmp.eq.s32.totalorder %s18, 0
      %p116 = por %p114, %p115
      %p117 = scmp.ne.s32.totalorder %s103, %s104
      %p118 = scmp.eq.s32.totalorder %s19, 3
      %p119 = por %p117, %p118
      %p121 = scmp.ne.s32.totalorder %s104, %s120
      %p122 = scmp.eq.s32.totalorder %s19, 0
      %p123 = por %p121, %p122
      %s124 = ssub.s32 %s20, %s39
      %s125 = ssub.s32 %s21, %s35
      %s126 = sor.u32 %s124, %s125
      %p127 = scmp.eq.s32.totalorder %s126, 0
      %s129 = sadd.s32 %s128, 1
      %s130 = scalar_select %p127, %s128, %s129
      %p133 = pneg %p127
      %p134 = scmp.eq.s32.totalorder %s13, 3
      %p135 = por %p133, %p134
      %p136 = scmp.ne.s32.totalorder %s128, %s131
      %p137 = scmp.eq.s32.totalorder %s13, 0
      %p138 = por %p136, %p137
      %p139 = scmp.ne.s32.totalorder %s128, %s131
      %p140 = scmp.eq.s32.totalorder %s18, 3
      %p141 = por %p139, %p140
      %p142 = scmp.ne.s32.totalorder %s131, %s132
      %p143 = scmp.eq.s32.totalorder %s18, 0
      %p144 = por %p142, %p143
      %p145 = scmp.ne.s32.totalorder %s131, %s132
      %p146 = scmp.eq.s32.totalorder %s19, 3
      %p147 = por %p145, %p146
      %p149 = scmp.ne.s32.totalorder %s132, %s148
      %p150 = scmp.eq.s32.totalorder %s19, 0
      %p151 = por %p149, %p150
      %p152 = scmp.le.s32.totalorder 1, %s13
      %p153 = scmp.lt.s32.totalorder %s13, 5
      %p154 = pnand %p152, %p153
      %p155 = pneg %p154
      // Predicated region
      $region9: #{tpu_custom_call.1} parent=5 // pred_check
        _
      $region10: #{tpu_custom_call.1} parent=5 // pred_check_branch
        %157 = sbr.rel (%p154) target = $region12
      $region11: #{tpu_custom_call.1} parent=5 // pred_region
        %s158 = ssub.s32 %s13, 1
        // Predicated region
        $region13: #{tpu_custom_call.1} parent=11 // pred_check
          %p159 = pneg %p88
        $region14: #{tpu_custom_call.1} parent=11 // pred_check_branch
          %161 = sbr.rel (%p159) target = $region16
        $region15: #{tpu_custom_call.1} parent=11 // pred_region
          %s162 = smul.u32 19, %s25
          %p163 = scmp.lt.s32.totalorder %s162, 18
          %s164 = scalar_select %p163, %s162, 18
          %p165 = scmp.lt.s32.totalorder %s24, 0
          %s166 = scalar_select %p165, %s24, 0
          %s167 = sadd.s32 %s166, %s164
          %s168 = smul.addr %s167, 4
          %s169 = scalar_lea.vmem %s1, %s168
          %s170 = smul.u32 19, %s25
        $region16: #{tpu_custom_call.1} parent=11 // pred_fallthru
          _
      $region12: #{tpu_custom_call.1} parent=5 // pred_fallthru
        _
      %p171 = scmp.lt.s32.totalorder %s13, 4
      // Predicated region
      $region17: #{tpu_custom_call.1} parent=5 // pred_check
        %p172 = pneg %p171
      $region18: #{tpu_custom_call.1} parent=5 // pred_check_branch
        %174 = sbr.rel (%p172) target = $region20
      $region19: #{tpu_custom_call.1} parent=5 // pred_region
        // Predicated region
        $region21: #{tpu_custom_call.1} parent=19 // pred_check
          %p175 = pneg %p54
        $region22: #{tpu_custom_call.1} parent=19 // pred_check_branch
          %177 = sbr.rel (%p175) target = $region24
        $region23: #{tpu_custom_call.1} parent=19 // pred_region
          %s178 = smul.u32 64, %s20
          %s179 = smul.u32 2, %s22
          %p180 = scmp.lt.s32.totalorder %s178, 255
          %s181 = scalar_select %p180, %s178, 255
          %p182 = scmp.lt.s32.totalorder %s179, 1
          %s183 = scalar_select %p182, %s179, 1
          %s184 = smul.addr %s181, 2
          %s185 = sadd.s32 %s183, %s184
          %s186 = smul.addr %s185, 4
          %s187 = scalar_lea.vmem %s0, %s186
          %s188 = smul.u32 64, %s20
          %s189 = smul.u32 2, %s22
        $region24: #{tpu_custom_call.1} parent=19 // pred_fallthru
          _
      $region20: #{tpu_custom_call.1} parent=5 // pred_fallthru
        _
      %p190 = scmp.le.s32.totalorder 1, %s13
      %p191 = scmp.lt.s32.totalorder %s13, 5
      %p192 = pnand %p190, %p191
      %p193 = pneg %p192
      // Predicated region
      $region25: #{tpu_custom_call.1} parent=5 // pred_check
        _
      $region26: #{tpu_custom_call.1} parent=5 // pred_check_branch
        %195 = sbr.rel (%p192) target = $region28
      $region27: #{tpu_custom_call.1} parent=5 // pred_region
        %s196 = ssub.s32 %s13, 1
        %s197 = smul.u32 64, %s23
        %s198 = smul.u32 2, %s25
        %p199 = scmp.lt.s32.totalorder %s197, 255
        %s200 = scalar_select %p199, %s197, 255
        %p201 = scmp.lt.s32.totalorder %s198, 1
        %s202 = scalar_select %p201, %s198, 1
        %s203 = smul.addr %s200, 2
        %s204 = sadd.s32 %s202, %s203
        %s205 = smul.addr %s204, 4
        %s206 = scalar_lea.vmem %s0, %s205
        %p207 = pneg %p60
        %p208 = pneg %p57
        %s209 = smul.u32 19, %s25
        %p210 = scmp.lt.s32.totalorder %s209, 18
        %s211 = scalar_select %p210, %s209, 18
        %p212 = scmp.lt.s32.totalorder %s24, 0
        %s213 = scalar_select %p212, %s24, 0
        %s214 = sadd.s32 %s213, %s211
        %s215 = smul.addr %s214, 4
        %s216 = scalar_lea.vmem %s1, %s215
        %p217 = pneg %p88
        %p218 = pneg %p85
        %p219 = pneg %p116
        %p220 = pneg %p113
        %s221 = smul.u32 64, %s23
        %p222 = scmp.lt.s32.totalorder %s221, 255
        %s223 = scalar_select %p222, %s221, 255
        %p224 = scmp.lt.s32.totalorder %s24, 0
        %s225 = scalar_select %p224, %s24, 0
        %s226 = sadd.s32 %s225, %s223
        %s227 = smul.addr %s226, 4
        %s228 = scalar_lea.vmem %s2, %s227
        %p229 = pneg %p144
        %p230 = pneg %p141
        %s231 = sand.u32 %s131, 1
        %s232 = scalar_lea.sflag [#allocation4], %s231
        %s233 = sand.u32 %s131, 1
        %s234 = smul.addr %s233, 8
        %s235 = scalar_lea.vmem [#allocation3], %s234
        %s236 = smul.u32 64, %s23
        %s237 = smul.u32 2, %s25
        %p238 = scmp.lt.s32.totalorder %s236, 255
        %s239 = scalar_select %p238, %s236, 255
        %p240 = scmp.lt.s32.totalorder %s237, 1
        %s241 = scalar_select %p240, %s237, 1
        %s242 = smul.addr %s239, 2
        %s243 = sadd.s32 %s241, %s242
        %s244 = smul.addr %s243, 4
        %s245 = scalar_lea.vmem %s0, %s244
        %s246 = smul.u32 64, %s23
        %s247 = smul.u32 2, %s25
        %s248 = smul.u32 19, %s25
        %p249 = scmp.lt.s32.totalorder %s248, 18
        %s250 = scalar_select %p249, %s248, 18
        %p251 = scmp.lt.s32.totalorder %s24, 0
        %s252 = scalar_select %p251, %s24, 0
        %s253 = sadd.s32 %s252, %s250
        %s254 = smul.addr %s253, 4
        %s255 = scalar_lea.vmem %s1, %s254
        %s256 = smul.u32 19, %s25
        %s257 = smul.u32 64, %s23
        %p258 = scmp.lt.s32.totalorder %s257, 255
        %s259 = scalar_select %p258, %s257, 255
        %p260 = scmp.lt.s32.totalorder %s24, 0
        %s261 = scalar_select %p260, %s24, 0
        %s262 = sadd.s32 %s261, %s259
        %s263 = smul.addr %s262, 4
        %s264 = scalar_lea.vmem %s2, %s263
        %s265 = smul.u32 64, %s23
        %p267 = scmp.eq.s32.totalorder %s25, 0
        // Predicated region
        $region29: #{tpu_custom_call.1} parent=27 // pred_check
          %p268 = pneg %p267
        $region30: #{tpu_custom_call.1} parent=27 // pred_check_branch
          %270 = sbr.rel (%p268) target = $region32
        $region31: #{tpu_custom_call.1} parent=27 // pred_region
          %vm271 = vcmask 523264
          %272 = vst.msk [vmem:[#allocation2] sm:$0xff] %vm271, 0.0
          %273 = vst.msk [vmem:[#allocation2 + $0x8] sm:$0xff] %vm271, 0.0
          %274 = vst.msk [vmem:[#allocation2 + $0x10] sm:$0xff] %vm271, 0.0
          %275 = vst.msk [vmem:[#allocation2 + $0x18] sm:$0xff] %vm271, 0.0
          %276 = vst.msk [vmem:[#allocation2 + $0x20] sm:$0xff] %vm271, 0.0
          %277 = vst.msk [vmem:[#allocation2 + $0x28] sm:$0xff] %vm271, 0.0
          %278 = vst.msk [vmem:[#allocation2 + $0x30] sm:$0xff] %vm271, 0.0
          %279 = vst.msk [vmem:[#allocation2 + $0x38] sm:$0xff] %vm271, 0.0
          %280 = vst.msk [vmem:[#allocation2 + $0x40] sm:$0xff] %vm271, 0.0
          %281 = vst.msk [vmem:[#allocation2 + $0x48] sm:$0xff] %vm271, 0.0
          %282 = vst.msk [vmem:[#allocation2 + $0x50] sm:$0xff] %vm271, 0.0
          %283 = vst.msk [vmem:[#allocation2 + $0x58] sm:$0xff] %vm271, 0.0
          %284 = vst.msk [vmem:[#allocation2 + $0x60] sm:$0xff] %vm271, 0.0
          %285 = vst.msk [vmem:[#allocation2 + $0x68] sm:$0xff] %vm271, 0.0
          %286 = vst.msk [vmem:[#allocation2 + $0x70] sm:$0xff] %vm271, 0.0
          %287 = vst.msk [vmem:[#allocation2 + $0x78] sm:$0xff] %vm271, 0.0
          %288 = vst.msk [vmem:[#allocation2 + $0x80] sm:$0xff] %vm271, 0.0
          %289 = vst.msk [vmem:[#allocation2 + $0x88] sm:$0xff] %vm271, 0.0
          %290 = vst.msk [vmem:[#allocation2 + $0x90] sm:$0xff] %vm271, 0.0
          %291 = vst.msk [vmem:[#allocation2 + $0x98] sm:$0xff] %vm271, 0.0
          %292 = vst.msk [vmem:[#allocation2 + $0xa0] sm:$0xff] %vm271, 0.0
          %293 = vst.msk [vmem:[#allocation2 + $0xa8] sm:$0xff] %vm271, 0.0
          %294 = vst.msk [vmem:[#allocation2 + $0xb0] sm:$0xff] %vm271, 0.0
          %295 = vst.msk [vmem:[#allocation2 + $0xb8] sm:$0xff] %vm271, 0.0
          %296 = vst.msk [vmem:[#allocation2 + $0xc0] sm:$0xff] %vm271, 0.0
          %297 = vst.msk [vmem:[#allocation2 + $0xc8] sm:$0xff] %vm271, 0.0
          %298 = vst.msk [vmem:[#allocation2 + $0xd0] sm:$0xff] %vm271, 0.0
          %299 = vst.msk [vmem:[#allocation2 + $0xd8] sm:$0xff] %vm271, 0.0
          %300 = vst.msk [vmem:[#allocation2 + $0xe0] sm:$0xff] %vm271, 0.0
          %301 = vst.msk [vmem:[#allocation2 + $0xe8] sm:$0xff] %vm271, 0.0
          %302 = vst.msk [vmem:[#allocation2 + $0xf0] sm:$0xff] %vm271, 0.0
          %303 = vst.msk [vmem:[#allocation2 + $0xf8] sm:$0xff] %vm271, 0.0
          %304 = vst.msk [vmem:[#allocation2 + $0x100] sm:$0xff] %vm271, 0.0
          %305 = vst.msk [vmem:[#allocation2 + $0x108] sm:$0xff] %vm271, 0.0
          %306 = vst.msk [vmem:[#allocation2 + $0x110] sm:$0xff] %vm271, 0.0
          %307 = vst.msk [vmem:[#allocation2 + $0x118] sm:$0xff] %vm271, 0.0
          %308 = vst.msk [vmem:[#allocation2 + $0x120] sm:$0xff] %vm271, 0.0
          %309 = vst.msk [vmem:[#allocation2 + $0x128] sm:$0xff] %vm271, 0.0
          %310 = vst.msk [vmem:[#allocation2 + $0x130] sm:$0xff] %vm271, 0.0
          %311 = vst.msk [vmem:[#allocation2 + $0x138] sm:$0xff] %vm271, 0.0
          %312 = vst.msk [vmem:[#allocation2 + $0x140] sm:$0xff] %vm271, 0.0
          %313 = vst.msk [vmem:[#allocation2 + $0x148] sm:$0xff] %vm271, 0.0
          %314 = vst.msk [vmem:[#allocation2 + $0x150] sm:$0xff] %vm271, 0.0
          %315 = vst.msk [vmem:[#allocation2 + $0x158] sm:$0xff] %vm271, 0.0
          %316 = vst.msk [vmem:[#allocation2 + $0x160] sm:$0xff] %vm271, 0.0
          %317 = vst.msk [vmem:[#allocation2 + $0x168] sm:$0xff] %vm271, 0.0
          %318 = vst.msk [vmem:[#allocation2 + $0x170] sm:$0xff] %vm271, 0.0
          %319 = vst.msk [vmem:[#allocation2 + $0x178] sm:$0xff] %vm271, 0.0
          %320 = vst.msk [vmem:[#allocation2 + $0x180] sm:$0xff] %vm271, 0.0
          %321 = vst.msk [vmem:[#allocation2 + $0x188] sm:$0xff] %vm271, 0.0
          %322 = vst.msk [vmem:[#allocation2 + $0x190] sm:$0xff] %vm271, 0.0
          %323 = vst.msk [vmem:[#allocation2 + $0x198] sm:$0xff] %vm271, 0.0
          %324 = vst.msk [vmem:[#allocation2 + $0x1a0] sm:$0xff] %vm271, 0.0
          %325 = vst.msk [vmem:[#allocation2 + $0x1a8] sm:$0xff] %vm271, 0.0
          %326 = vst.msk [vmem:[#allocation2 + $0x1b0] sm:$0xff] %vm271, 0.0
          %327 = vst.msk [vmem:[#allocation2 + $0x1b8] sm:$0xff] %vm271, 0.0
          %328 = vst.msk [vmem:[#allocation2 + $0x1c0] sm:$0xff] %vm271, 0.0
          %329 = vst.msk [vmem:[#allocation2 + $0x1c8] sm:$0xff] %vm271, 0.0
          %330 = vst.msk [vmem:[#allocation2 + $0x1d0] sm:$0xff] %vm271, 0.0
          %331 = vst.msk [vmem:[#allocation2 + $0x1d8] sm:$0xff] %vm271, 0.0
          %332 = vst.msk [vmem:[#allocation2 + $0x1e0] sm:$0xff] %vm271, 0.0
          %333 = vst.msk [vmem:[#allocation2 + $0x1e8] sm:$0xff] %vm271, 0.0
          %334 = vst.msk [vmem:[#allocation2 + $0x1f0] sm:$0xff] %vm271, 0.0
          %335 = vst.msk [vmem:[#allocation2 + $0x1f8] sm:$0xff] %vm271, 0.0
        $region32: #{tpu_custom_call.1} parent=27 // pred_fallthru
          _
        %v336 = vld [vmem:[#allocation2] sm:$0xff]
        %v337 = vld [vmem:[#allocation2 + $0x8] sm:$0xff]
        %v338 = vld [vmem:[#allocation2 + $0x10] sm:$0xff]
        %v339 = vld [vmem:[#allocation2 + $0x18] sm:$0xff]
        %v340 = vld [vmem:[#allocation2 + $0x20] sm:$0xff]
        %v341 = vld [vmem:[#allocation2 + $0x28] sm:$0xff]
        %v342 = vld [vmem:[#allocation2 + $0x30] sm:$0xff]
        %v343 = vld [vmem:[#allocation2 + $0x38] sm:$0xff]
        %v344 = vld [vmem:[#allocation2 + $0x40] sm:$0xff]
        %v345 = vld [vmem:[#allocation2 + $0x48] sm:$0xff]
        %v346 = vld [vmem:[#allocation2 + $0x50] sm:$0xff]
        %v347 = vld [vmem:[#allocation2 + $0x58] sm:$0xff]
        %v348 = vld [vmem:[#allocation2 + $0x60] sm:$0xff]
        %v349 = vld [vmem:[#allocation2 + $0x68] sm:$0xff]
        %v350 = vld [vmem:[#allocation2 + $0x70] sm:$0xff]
        %v351 = vld [vmem:[#allocation2 + $0x78] sm:$0xff]
        %v352 = vld [vmem:[#allocation2 + $0x80] sm:$0xff]
        %v353 = vld [vmem:[#allocation2 + $0x88] sm:$0xff]
        %v354 = vld [vmem:[#allocation2 + $0x90] sm:$0xff]
        %v355 = vld [vmem:[#allocation2 + $0x98] sm:$0xff]
        %v356 = vld [vmem:[#allocation2 + $0xa0] sm:$0xff]
        %v357 = vld [vmem:[#allocation2 + $0xa8] sm:$0xff]
        %v358 = vld [vmem:[#allocation2 + $0xb0] sm:$0xff]
        %v359 = vld [vmem:[#allocation2 + $0xb8] sm:$0xff]
        %v360 = vld [vmem:[#allocation2 + $0xc0] sm:$0xff]
        %v361 = vld [vmem:[#allocation2 + $0xc8] sm:$0xff]
        %v362 = vld [vmem:[#allocation2 + $0xd0] sm:$0xff]
        %v363 = vld [vmem:[#allocation2 + $0xd8] sm:$0xff]
        %v364 = vld [vmem:[#allocation2 + $0xe0] sm:$0xff]
        %v365 = vld [vmem:[#allocation2 + $0xe8] sm:$0xff]
        %v366 = vld [vmem:[#allocation2 + $0xf0] sm:$0xff]
        %v367 = vld [vmem:[#allocation2 + $0xf8] sm:$0xff]
        %v368 = vld [vmem:[#allocation2 + $0x100] sm:$0xff]
        %v369 = vld [vmem:[#allocation2 + $0x108] sm:$0xff]
        %v370 = vld [vmem:[#allocation2 + $0x110] sm:$0xff]
        %v371 = vld [vmem:[#allocation2 + $0x118] sm:$0xff]
        %v372 = vld [vmem:[#allocation2 + $0x120] sm:$0xff]
        %v373 = vld [vmem:[#allocation2 + $0x128] sm:$0xff]
        %v374 = vld [vmem:[#allocation2 + $0x130] sm:$0xff]
        %v375 = vld [vmem:[#allocation2 + $0x138] sm:$0xff]
        %v376 = vld [vmem:[#allocation2 + $0x140] sm:$0xff]
        %v377 = vld [vmem:[#allocation2 + $0x148] sm:$0xff]
        %v378 = vld [vmem:[#allocation2 + $0x150] sm:$0xff]
        %v379 = vld [vmem:[#allocation2 + $0x158] sm:$0xff]
        %v380 = vld [vmem:[#allocation2 + $0x160] sm:$0xff]
        %v381 = vld [vmem:[#allocation2 + $0x168] sm:$0xff]
        %v382 = vld [vmem:[#allocation2 + $0x170] sm:$0xff]
        %v383 = vld [vmem:[#allocation2 + $0x178] sm:$0xff]
        %v384 = vld [vmem:[#allocation2 + $0x180] sm:$0xff]
        %v385 = vld [vmem:[#allocation2 + $0x188] sm:$0xff]
        %v386 = vld [vmem:[#allocation2 + $0x190] sm:$0xff]
        %v387 = vld [vmem:[#allocation2 + $0x198] sm:$0xff]
        %v388 = vld [vmem:[#allocation2 + $0x1a0] sm:$0xff]
        %v389 = vld [vmem:[#allocation2 + $0x1a8] sm:$0xff]
        %v390 = vld [vmem:[#allocation2 + $0x1b0] sm:$0xff]
        %v391 = vld [vmem:[#allocation2 + $0x1b8] sm:$0xff]
        %v392 = vld [vmem:[#allocation2 + $0x1c0] sm:$0xff]
        %v393 = vld [vmem:[#allocation2 + $0x1c8] sm:$0xff]
        %v394 = vld [vmem:[#allocation2 + $0x1d0] sm:$0xff]
        %v395 = vld [vmem:[#allocation2 + $0x1d8] sm:$0xff]
        %v396 = vld [vmem:[#allocation2 + $0x1e0] sm:$0xff]
        %v397 = vld [vmem:[#allocation2 + $0x1e8] sm:$0xff]
        %v398 = vld [vmem:[#allocation2 + $0x1f0] sm:$0xff]
        %v399 = vld [vmem:[#allocation2 + $0x1f8] sm:$0xff]
        %v400 = vld [vmem:[%s245] sm:$0xff]
        %v401 = vld [vmem:[%s245 + $0x8] sm:$0xff]
        %v402 = vld [vmem:[%s245 + $0x10] sm:$0xff]
        %v403 = vld [vmem:[%s245 + $0x18] sm:$0xff]
        %v404 = vld [vmem:[%s245 + $0x20] sm:$0xff]
        %v405 = vld [vmem:[%s245 + $0x28] sm:$0xff]
        %v406 = vld [vmem:[%s245 + $0x30] sm:$0xff]
        %v407 = vld [vmem:[%s245 + $0x38] sm:$0xff]
        %v408 = vld [vmem:[%s245 + $0x40] sm:$0xff]
        %v409 = vld [vmem:[%s245 + $0x48] sm:$0xff]
        %v410 = vld [vmem:[%s245 + $0x50] sm:$0xff]
        %v411 = vld [vmem:[%s245 + $0x58] sm:$0xff]
        %v412 = vld [vmem:[%s245 + $0x60] sm:$0xff]
        %v413 = vld [vmem:[%s245 + $0x68] sm:$0xff]
        %v414 = vld [vmem:[%s245 + $0x70] sm:$0xff]
        %v415 = vld [vmem:[%s245 + $0x78] sm:$0xff]
        %v416 = vld [vmem:[%s245 + $0x80] sm:$0xff]
        %v417 = vld [vmem:[%s245 + $0x88] sm:$0xff]
        %v418 = vld [vmem:[%s245 + $0x90] sm:$0xff]
        %v419 = vld [vmem:[%s245 + $0x98] sm:$0xff]
        %v420 = vld [vmem:[%s245 + $0xa0] sm:$0xff]
        %v421 = vld [vmem:[%s245 + $0xa8] sm:$0xff]
        %v422 = vld [vmem:[%s245 + $0xb0] sm:$0xff]
        %v423 = vld [vmem:[%s245 + $0xb8] sm:$0xff]
        %v424 = vld [vmem:[%s245 + $0xc0] sm:$0xff]
        %v425 = vld [vmem:[%s245 + $0xc8] sm:$0xff]
        %v426 = vld [vmem:[%s245 + $0xd0] sm:$0xff]
        %v427 = vld [vmem:[%s245 + $0xd8] sm:$0xff]
        %v428 = vld [vmem:[%s245 + $0xe0] sm:$0xff]
        %v429 = vld [vmem:[%s245 + $0xe8] sm:$0xff]
        %v430 = vld [vmem:[%s245 + $0xf0] sm:$0xff]
        %v431 = vld [vmem:[%s245 + $0xf8] sm:$0xff]
        %v432 = vld [vmem:[%s245 + $0x100] sm:$0xff]
        %v433 = vld [vmem:[%s245 + $0x108] sm:$0xff]
        %v434 = vld [vmem:[%s245 + $0x110] sm:$0xff]
        %v435 = vld [vmem:[%s245 + $0x118] sm:$0xff]
        %v436 = vld [vmem:[%s245 + $0x120] sm:$0xff]
        %v437 = vld [vmem:[%s245 + $0x128] sm:$0xff]
        %v438 = vld [vmem:[%s245 + $0x130] sm:$0xff]
        %v439 = vld [vmem:[%s245 + $0x138] sm:$0xff]
        %v440 = vld [vmem:[%s245 + $0x140] sm:$0xff]
        %v441 = vld [vmem:[%s245 + $0x148] sm:$0xff]
        %v442 = vld [vmem:[%s245 + $0x150] sm:$0xff]
        %v443 = vld [vmem:[%s245 + $0x158] sm:$0xff]
        %v444 = vld [vmem:[%s245 + $0x160] sm:$0xff]
        %v445 = vld [vmem:[%s245 + $0x168] sm:$0xff]
        %v446 = vld [vmem:[%s245 + $0x170] sm:$0xff]
        %v447 = vld [vmem:[%s245 + $0x178] sm:$0xff]
        %v448 = vld [vmem:[%s245 + $0x180] sm:$0xff]
        %v449 = vld [vmem:[%s245 + $0x188] sm:$0xff]
        %v450 = vld [vmem:[%s245 + $0x190] sm:$0xff]
        %v451 = vld [vmem:[%s245 + $0x198] sm:$0xff]
        %v452 = vld [vmem:[%s245 + $0x1a0] sm:$0xff]
        %v453 = vld [vmem:[%s245 + $0x1a8] sm:$0xff]
        %v454 = vld [vmem:[%s245 + $0x1b0] sm:$0xff]
        %v455 = vld [vmem:[%s245 + $0x1b8] sm:$0xff]
        %v456 = vld [vmem:[%s245 + $0x1c0] sm:$0xff]
        %v457 = vld [vmem:[%s245 + $0x1c8] sm:$0xff]
        %v458 = vld [vmem:[%s245 + $0x1d0] sm:$0xff]
        %v459 = vld [vmem:[%s245 + $0x1d8] sm:$0xff]
        %v460 = vld [vmem:[%s245 + $0x1e0] sm:$0xff]
        %v461 = vld [vmem:[%s245 + $0x1e8] sm:$0xff]
        %v462 = vld [vmem:[%s245 + $0x1f0] sm:$0xff]
        %v463 = vld [vmem:[%s245 + $0x1f8] sm:$0xff]
        %v464 = vld [vmem:[%s255] sm:$0xf]
        %v465 = vld [vmem:[%s255 + $0x4] sm:$0xf]
        %v466 = vld [vmem:[%s255 + $0x8] sm:$0xf]
        %v467 = vld [vmem:[%s255 + $0xc] sm:$0xf]
        %v468 = vld [vmem:[%s255 + $0x10] sm:$0xf]
        %v469 = vld [vmem:[%s255 + $0x14] sm:$0xf]
        %v470 = vld [vmem:[%s255 + $0x18] sm:$0xf]
        %v471 = vld [vmem:[%s255 + $0x1c] sm:$0xf]
        %v472 = vld [vmem:[%s255 + $0x20] sm:$0xf]
        %v473 = vld [vmem:[%s255 + $0x24] sm:$0xf]
        %v474 = vld [vmem:[%s255 + $0x28] sm:$0xf]
        %v475 = vld [vmem:[%s255 + $0x2c] sm:$0xf]
        %v476 = vld [vmem:[%s255 + $0x30] sm:$0xf]
        %v477 = vld [vmem:[%s255 + $0x34] sm:$0xf]
        %v478 = vld [vmem:[%s255 + $0x38] sm:$0xf]
        %v479 = vld [vmem:[%s255 + $0x3c] sm:$0xf]
        %v480 = vld [vmem:[%s255 + $0x40] sm:$0xf]
        %v481 = vld [vmem:[%s255 + $0x44] sm:$0xf]
        %v482 = vld [vmem:[%s255 + $0x48] sm:$0x3]
        %v547 = vunpack.c.l.b16 %v400
        %v548 = vunpack.c.h.b16 %v400
        %v549 = vunpack.c.l.b16 %v401
        %v550 = vunpack.c.h.b16 %v401
        %v551 = vunpack.c.l.b16 %v402
        %v552 = vunpack.c.h.b16 %v402
        %v553 = vunpack.c.l.b16 %v403
        %v554 = vunpack.c.h.b16 %v403
        %v555 = vunpack.c.l.b16 %v404
        %v556 = vunpack.c.h.b16 %v404
        %v557 = vunpack.c.l.b16 %v405
        %v558 = vunpack.c.h.b16 %v405
        %v559 = vunpack.c.l.b16 %v406
        %v560 = vunpack.c.h.b16 %v406
        %v561 = vunpack.c.l.b16 %v407
        %v562 = vunpack.c.h.b16 %v407
        %v563 = vunpack.c.l.b16 %v408
        %v564 = vunpack.c.h.b16 %v408
        %v565 = vunpack.c.l.b16 %v409
        %v566 = vunpack.c.h.b16 %v409
        %v567 = vunpack.c.l.b16 %v410
        %v568 = vunpack.c.h.b16 %v410
        %v569 = vunpack.c.l.b16 %v411
        %v570 = vunpack.c.h.b16 %v411
        %v571 = vunpack.c.l.b16 %v412
        %v572 = vunpack.c.h.b16 %v412
        %v573 = vunpack.c.l.b16 %v413
        %v574 = vunpack.c.h.b16 %v413
        %v575 = vunpack.c.l.b16 %v414
        %v576 = vunpack.c.h.b16 %v414
        %v577 = vunpack.c.l.b16 %v415
        %v578 = vunpack.c.h.b16 %v415
        %v579 = vunpack.c.l.b16 %v416
        %v580 = vunpack.c.h.b16 %v416
        %v581 = vunpack.c.l.b16 %v417
        %v582 = vunpack.c.h.b16 %v417
        %v583 = vunpack.c.l.b16 %v418
        %v584 = vunpack.c.h.b16 %v418
        %v585 = vunpack.c.l.b16 %v419
        %v586 = vunpack.c.h.b16 %v419
        %v587 = vunpack.c.l.b16 %v420
        %v588 = vunpack.c.h.b16 %v420
        %v589 = vunpack.c.l.b16 %v421
        %v590 = vunpack.c.h.b16 %v421
        %v591 = vunpack.c.l.b16 %v422
        %v592 = vunpack.c.h.b16 %v422
        %v593 = vunpack.c.l.b16 %v423
        %v594 = vunpack.c.h.b16 %v423
        %v595 = vunpack.c.l.b16 %v424
        %v596 = vunpack.c.h.b16 %v424
        %v597 = vunpack.c.l.b16 %v425
        %v598 = vunpack.c.h.b16 %v425
        %v599 = vunpack.c.l.b16 %v426
        %v600 = vunpack.c.h.b16 %v426
        %v601 = vunpack.c.l.b16 %v427
        %v602 = vunpack.c.h.b16 %v427
        %v603 = vunpack.c.l.b16 %v428
        %v604 = vunpack.c.h.b16 %v428
        %v605 = vunpack.c.l.b16 %v429
        %v606 = vunpack.c.h.b16 %v429
        %v607 = vunpack.c.l.b16 %v430
        %v608 = vunpack.c.h.b16 %v430
        %v609 = vunpack.c.l.b16 %v431
        %v610 = vunpack.c.h.b16 %v431
        %v611 = vunpack.c.l.b16 %v432
        %v612 = vunpack.c.h.b16 %v432
        %v613 = vunpack.c.l.b16 %v433
        %v614 = vunpack.c.h.b16 %v433
        %v615 = vunpack.c.l.b16 %v434
        %v616 = vunpack.c.h.b16 %v434
        %v617 = vunpack.c.l.b16 %v435
        %v618 = vunpack.c.h.b16 %v435
        %v619 = vunpack.c.l.b16 %v436
        %v620 = vunpack.c.h.b16 %v436
        %v621 = vunpack.c.l.b16 %v437
        %v622 = vunpack.c.h.b16 %v437
        %v623 = vunpack.c.l.b16 %v438
        %v624 = vunpack.c.h.b16 %v438
        %v625 = vunpack.c.l.b16 %v439
        %v626 = vunpack.c.h.b16 %v439
        %v627 = vunpack.c.l.b16 %v440
        %v628 = vunpack.c.h.b16 %v440
        %v629 = vunpack.c.l.b16 %v441
        %v630 = vunpack.c.h.b16 %v441
        %v631 = vunpack.c.l.b16 %v442
        %v632 = vunpack.c.h.b16 %v442
        %v633 = vunpack.c.l.b16 %v443
        %v634 = vunpack.c.h.b16 %v443
        %v635 = vunpack.c.l.b16 %v444
        %v636 = vunpack.c.h.b16 %v444
        %v637 = vunpack.c.l.b16 %v445
        %v638 = vunpack.c.h.b16 %v445
        %v639 = vunpack.c.l.b16 %v446
        %v640 = vunpack.c.h.b16 %v446
        %v641 = vunpack.c.l.b16 %v447
        %v642 = vunpack.c.h.b16 %v447
        %v643 = vunpack.c.l.b16 %v448
        %v644 = vunpack.c.h.b16 %v448
        %v645 = vunpack.c.l.b16 %v449
        %v646 = vunpack.c.h.b16 %v449
        %v647 = vunpack.c.l.b16 %v450
        %v648 = vunpack.c.h.b16 %v450
        %v649 = vunpack.c.l.b16 %v451
        %v650 = vunpack.c.h.b16 %v451
        %v651 = vunpack.c.l.b16 %v452
        %v652 = vunpack.c.h.b16 %v452
        %v653 = vunpack.c.l.b16 %v453
        %v654 = vunpack.c.h.b16 %v453
        %v655 = vunpack.c.l.b16 %v454
        %v656 = vunpack.c.h.b16 %v454
        %v657 = vunpack.c.l.b16 %v455
        %v658 = vunpack.c.h.b16 %v455
        %v659 = vunpack.c.l.b16 %v456
        %v660 = vunpack.c.h.b16 %v456
        %v661 = vunpack.c.l.b16 %v457
        %v662 = vunpack.c.h.b16 %v457
        %v663 = vunpack.c.l.b16 %v458
        %v664 = vunpack.c.h.b16 %v458
        %v665 = vunpack.c.l.b16 %v459
        %v666 = vunpack.c.h.b16 %v459
        %v667 = vunpack.c.l.b16 %v460
        %v668 = vunpack.c.h.b16 %v460
        %v669 = vunpack.c.l.b16 %v461
        %v670 = vunpack.c.h.b16 %v461
        %v671 = vunpack.c.l.b16 %v462
        %v672 = vunpack.c.h.b16 %v462
        %v673 = vunpack.c.l.b16 %v463
        %v674 = vunpack.c.h.b16 %v463
        %v675 = vpack.c.b16 %v549, %v547
        %v676 = vpack.c.b16 %v550, %v548
        %v677 = vpack.c.b16 %v553, %v551
        %v678 = vpack.c.b16 %v554, %v552
        %v679 = vpack.c.b16 %v557, %v555
        %v680 = vpack.c.b16 %v558, %v556
        %v681 = vpack.c.b16 %v561, %v559
        %v682 = vpack.c.b16 %v562, %v560
        %v683 = vpack.c.b16 %v565, %v563
        %v684 = vpack.c.b16 %v566, %v564
        %v685 = vpack.c.b16 %v569, %v567
        %v686 = vpack.c.b16 %v570, %v568
        %v687 = vpack.c.b16 %v573, %v571
        %v688 = vpack.c.b16 %v574, %v572
        %v689 = vpack.c.b16 %v577, %v575
        %v690 = vpack.c.b16 %v578, %v576
        %v691 = vpack.c.b16 %v581, %v579
        %v692 = vpack.c.b16 %v582, %v580
        %v693 = vpack.c.b16 %v585, %v583
        %v694 = vpack.c.b16 %v586, %v584
        %v695 = vpack.c.b16 %v589, %v587
        %v696 = vpack.c.b16 %v590, %v588
        %v697 = vpack.c.b16 %v593, %v591
        %v698 = vpack.c.b16 %v594, %v592
        %v699 = vpack.c.b16 %v597, %v595
        %v700 = vpack.c.b16 %v598, %v596
        %v701 = vpack.c.b16 %v601, %v599
        %v702 = vpack.c.b16 %v602, %v600
        %v703 = vpack.c.b16 %v605, %v603
        %v704 = vpack.c.b16 %v606, %v604
        %v705 = vpack.c.b16 %v609, %v607
        %v706 = vpack.c.b16 %v610, %v608
        %v707 = vpack.c.b16 %v613, %v611
        %v708 = vpack.c.b16 %v614, %v612
        %v709 = vpack.c.b16 %v617, %v615
        %v710 = vpack.c.b16 %v618, %v616
        %v711 = vpack.c.b16 %v621, %v619
        %v712 = vpack.c.b16 %v622, %v620
        %v713 = vpack.c.b16 %v625, %v623
        %v714 = vpack.c.b16 %v626, %v624
        %v715 = vpack.c.b16 %v629, %v627
        %v716 = vpack.c.b16 %v630, %v628
        %v717 = vpack.c.b16 %v633, %v631
        %v718 = vpack.c.b16 %v634, %v632
        %v719 = vpack.c.b16 %v637, %v635
        %v720 = vpack.c.b16 %v638, %v636
        %v721 = vpack.c.b16 %v641, %v639
        %v722 = vpack.c.b16 %v642, %v640
        %v723 = vpack.c.b16 %v645, %v643
        %v724 = vpack.c.b16 %v646, %v644
        %v725 = vpack.c.b16 %v649, %v647
        %v726 = vpack.c.b16 %v650, %v648
        %v727 = vpack.c.b16 %v653, %v651
        %v728 = vpack.c.b16 %v654, %v652
        %v729 = vpack.c.b16 %v657, %v655
        %v730 = vpack.c.b16 %v658, %v656
        %v731 = vpack.c.b16 %v661, %v659
        %v732 = vpack.c.b16 %v662, %v660
        %v733 = vpack.c.b16 %v665, %v663
        %v734 = vpack.c.b16 %v666, %v664
        %v735 = vpack.c.b16 %v669, %v667
        %v736 = vpack.c.b16 %v670, %v668
        %v737 = vpack.c.b16 %v673, %v671
        %v738 = vpack.c.b16 %v674, %v672
        %v790 = vunpack.c.l.b16 %v464
        %v791 = vunpack.c.l.b16 %v465
        %v792 = vunpack.c.l.b16 %v466
        %v793 = vunpack.c.l.b16 %v467
        %v794 = vunpack.c.l.b16 %v468
        %v795 = vunpack.c.l.b16 %v469
        %v796 = vunpack.c.l.b16 %v470
        %v797 = vunpack.c.l.b16 %v471
        %v798 = vunpack.c.l.b16 %v472
        %v799 = vunpack.c.l.b16 %v473
        %v800 = vunpack.c.l.b16 %v474
        %v801 = vunpack.c.l.b16 %v475
        %v802 = vunpack.c.l.b16 %v476
        %v803 = vunpack.c.l.b16 %v477
        %v804 = vunpack.c.l.b16 %v478
        %v805 = vunpack.c.l.b16 %v479
        %v806 = vunpack.c.l.b16 %v480
        %v807 = vunpack.c.l.b16 %v481
        %v808 = vunpack.c.l.b16 %v482
        %v809 = vpack.c.b16 %v791, %v790
        %v810 = vpack.c.b16 %v793, %v792
        %v811 = vpack.c.b16 %v795, %v794
        %v812 = vpack.c.b16 %v797, %v796
        %v813 = vpack.c.b16 %v799, %v798
        %v814 = vpack.c.b16 %v801, %v800
        %v815 = vpack.c.b16 %v803, %v802
        %v816 = vpack.c.b16 %v805, %v804
        %v817 = vpack.c.b16 %v807, %v806
        %v818 = vpack.c.b16 %v808, %v808
        %vm828 = vcmask 154624
        %v830 = vsel %vm828, %v676, 0
        %v833 = vsel %vm828, %v678, 0
        %v836 = vsel %vm828, %v680, 0
        %v839 = vsel %vm828, %v682, 0
        %v842 = vsel %vm828, %v684, 0
        %v845 = vsel %vm828, %v686, 0
        %v848 = vsel %vm828, %v688, 0
        %v851 = vsel %vm828, %v690, 0
        %v854 = vsel %vm828, %v692, 0
        %v857 = vsel %vm828, %v694, 0
        %v860 = vsel %vm828, %v696, 0
        %v863 = vsel %vm828, %v698, 0
        %v866 = vsel %vm828, %v700, 0
        %v869 = vsel %vm828, %v702, 0
        %v872 = vsel %vm828, %v704, 0
        %v875 = vsel %vm828, %v706, 0
        %v878 = vsel %vm828, %v708, 0
        %v881 = vsel %vm828, %v710, 0
        %v884 = vsel %vm828, %v712, 0
        %v887 = vsel %vm828, %v714, 0
        %v890 = vsel %vm828, %v716, 0
        %v893 = vsel %vm828, %v718, 0
        %v896 = vsel %vm828, %v720, 0
        %v899 = vsel %vm828, %v722, 0
        %v902 = vsel %vm828, %v724, 0
        %v905 = vsel %vm828, %v726, 0
        %v908 = vsel %vm828, %v728, 0
        %v911 = vsel %vm828, %v730, 0
        %v914 = vsel %vm828, %v732, 0
        %v917 = vsel %vm828, %v734, 0
        %v920 = vsel %vm828, %v736, 0
        %v923 = vsel %vm828, %v738, 0
        %vm925 = vcmask 1040384
        %vm926 = vcmask 1041408
        %v927 = vsel %vm925, 4294967295, 65535
        %v928 = vsel %vm926, %v927, 0
        %v930 = vand.u32 %v818, %v928
        %932 = vmatprep.subr.bf16.mxu0 0
        %933 = vmatpush1.bf16.msra.mxu0 %v816
        %934 = vmatprep.subr.bf16.mxu0 0
        %935 = vmatpush1.bf16.msra.mxu0 %v815
        %936 = vmatprep.subr.bf16.mxu0 0
        %937 = vmatpush1.bf16.msra.mxu0 %v814
        %938 = vmatprep.subr.bf16.mxu0 0
        %939 = vmatpush1.bf16.msra.mxu0 %v813
        %940 = vmatprep.subr.bf16.mxu0 0
        %941 = vmatpush1.bf16.msra.mxu0 %v812
        %942 = vmatprep.subr.bf16.mxu0 0
        %943 = vmatpush1.bf16.msra.mxu0 %v811
        %944 = vmatprep.subr.bf16.mxu0 0
        %945 = vmatpush1.bf16.msra.mxu0 %v810
        %946 = vmatprep.subr.bf16.mxu0 0
        %947 = vmatpush1.bf16.msra.mxu0 %v809
        %948 = vmatprep.subr.bf16.mxu0 0
        %949 = vmatpush2.bf16.msra.mxu0 0
        %950 = vmatprep.subr.bf16.mxu0 0
        %951 = vmatpush2.bf16.msra.mxu0 0
        %952 = vmatprep.subr.bf16.mxu0 0
        %953 = vmatpush2.bf16.msra.mxu0 0
        %954 = vmatprep.subr.bf16.mxu0 0
        %955 = vmatpush2.bf16.msra.mxu0 0
        %956 = vmatprep.subr.bf16.mxu0 0
        %957 = vmatpush2.bf16.msra.mxu0 0
        %958 = vmatprep.subr.bf16.mxu0 0
        %959 = vmatpush2.bf16.msra.mxu0 0
        %960 = vmatprep.subr.bf16.mxu0 0
        %961 = vmatpush2.bf16.msra.mxu0 %v930
        %962 = vmatprep.subr.bf16.mxu0 0
        %963 = vmatpush2.bf16.msra.mxu0 %v817
        %964 = vmatprep.mubr.bf16.mxu0 %v830
        %965 = vmatmul.mubr.bf16.gmra.mxu0 %v675
        %v966 = vpop.f32.mrf.mxu0
        %v967 = vadd.f32 0.0, %v966
        %v968 = vpop.f32.mrf.mxu0
        %v969 = vpop.f32.mrf.mxu0
        %v970 = vadd.f32 0.0, %v969
        %v971 = vpop.f32.mrf.mxu0
        %972 = vmatprep.mubr.bf16.mxu0 %v833
        %973 = vmatmul.mubr.bf16.gmra.mxu0 %v677
        %v974 = vpop.f32.mrf.mxu0
        %v975 = vadd.f32 0.0, %v974
        %v976 = vpop.f32.mrf.mxu0
        %v977 = vpop.f32.mrf.mxu0
        %v978 = vadd.f32 0.0, %v977
        %v979 = vpop.f32.mrf.mxu0
        %980 = vmatprep.mubr.bf16.mxu0 %v836
        %981 = vmatmul.mubr.bf16.gmra.mxu0 %v679
        %v982 = vpop.f32.mrf.mxu0
        %v983 = vadd.f32 0.0, %v982
        %v984 = vpop.f32.mrf.mxu0
        %v985 = vpop.f32.mrf.mxu0
        %v986 = vadd.f32 0.0, %v985
        %v987 = vpop.f32.mrf.mxu0
        %988 = vmatprep.mubr.bf16.mxu0 %v839
        %989 = vmatmul.mubr.bf16.gmra.mxu0 %v681
        %v990 = vpop.f32.mrf.mxu0
        %v991 = vadd.f32 0.0, %v990
        %v992 = vpop.f32.mrf.mxu0
        %v993 = vpop.f32.mrf.mxu0
        %v994 = vadd.f32 0.0, %v993
        %v995 = vpop.f32.mrf.mxu0
        %996 = vmatprep.mubr.bf16.mxu0 %v842
        %997 = vmatmul.mubr.bf16.gmra.mxu0 %v683
        %v998 = vpop.f32.mrf.mxu0
        %v999 = vadd.f32 0.0, %v998
        %v1000 = vpop.f32.mrf.mxu0
        %v1001 = vpop.f32.mrf.mxu0
        %v1002 = vadd.f32 0.0, %v1001
        %v1003 = vpop.f32.mrf.mxu0
        %1004 = vmatprep.mubr.bf16.mxu0 %v845
        %1005 = vmatmul.mubr.bf16.gmra.mxu0 %v685
        %v1006 = vpop.f32.mrf.mxu0
        %v1007 = vadd.f32 0.0, %v1006
        %v1008 = vpop.f32.mrf.mxu0
        %v1009 = vpop.f32.mrf.mxu0
        %v1010 = vadd.f32 0.0, %v1009
        %v1011 = vpop.f32.mrf.mxu0
        %1012 = vmatprep.mubr.bf16.mxu0 %v848
        %1013 = vmatmul.mubr.bf16.gmra.mxu0 %v687
        %v1014 = vpop.f32.mrf.mxu0
        %v1015 = vadd.f32 0.0, %v1014
        %v1016 = vpop.f32.mrf.mxu0
        %v1017 = vpop.f32.mrf.mxu0
        %v1018 = vadd.f32 0.0, %v1017
        %v1019 = vpop.f32.mrf.mxu0
        %1020 = vmatprep.mubr.bf16.mxu0 %v851
        %1021 = vmatmul.mubr.bf16.gmra.mxu0 %v689
        %v1022 = vpop.f32.mrf.mxu0
        %v1023 = vadd.f32 0.0, %v1022
        %v1024 = vpop.f32.mrf.mxu0
        %v1025 = vpop.f32.mrf.mxu0
        %v1026 = vadd.f32 0.0, %v1025
        %v1027 = vpop.f32.mrf.mxu0
        %1028 = vmatprep.mubr.bf16.mxu0 %v854
        %1029 = vmatmul.mubr.bf16.gmra.mxu0 %v691
        %v1030 = vpop.f32.mrf.mxu0
        %v1031 = vadd.f32 0.0, %v1030
        %v1032 = vpop.f32.mrf.mxu0
        %v1033 = vpop.f32.mrf.mxu0
        %v1034 = vadd.f32 0.0, %v1033
        %v1035 = vpop.f32.mrf.mxu0
        %1036 = vmatprep.mubr.bf16.mxu0 %v857
        %1037 = vmatmul.mubr.bf16.gmra.mxu0 %v693
        %v1038 = vpop.f32.mrf.mxu0
        %v1039 = vadd.f32 0.0, %v1038
        %v1040 = vpop.f32.mrf.mxu0
        %v1041 = vpop.f32.mrf.mxu0
        %v1042 = vadd.f32 0.0, %v1041
        %v1043 = vpop.f32.mrf.mxu0
        %1044 = vmatprep.mubr.bf16.mxu0 %v860
        %1045 = vmatmul.mubr.bf16.gmra.mxu0 %v695
        %v1046 = vpop.f32.mrf.mxu0
        %v1047 = vadd.f32 0.0, %v1046
        %v1048 = vpop.f32.mrf.mxu0
        %v1049 = vpop.f32.mrf.mxu0
        %v1050 = vadd.f32 0.0, %v1049
        %v1051 = vpop.f32.mrf.mxu0
        %1052 = vmatprep.mubr.bf16.mxu0 %v863
        %1053 = vmatmul.mubr.bf16.gmra.mxu0 %v697
        %v1054 = vpop.f32.mrf.mxu0
        %v1055 = vadd.f32 0.0, %v1054
        %v1056 = vpop.f32.mrf.mxu0
        %v1057 = vpop.f32.mrf.mxu0
        %v1058 = vadd.f32 0.0, %v1057
        %v1059 = vpop.f32.mrf.mxu0
        %1060 = vmatprep.mubr.bf16.mxu0 %v866
        %1061 = vmatmul.mubr.bf16.gmra.mxu0 %v699
        %v1062 = vpop.f32.mrf.mxu0
        %v1063 = vadd.f32 0.0, %v1062
        %v1064 = vpop.f32.mrf.mxu0
        %v1065 = vpop.f32.mrf.mxu0
        %v1066 = vadd.f32 0.0, %v1065
        %v1067 = vpop.f32.mrf.mxu0
        %1068 = vmatprep.mubr.bf16.mxu0 %v869
        %1069 = vmatmul.mubr.bf16.gmra.mxu0 %v701
        %v1070 = vpop.f32.mrf.mxu0
        %v1071 = vadd.f32 0.0, %v1070
        %v1072 = vpop.f32.mrf.mxu0
        %v1073 = vpop.f32.mrf.mxu0
        %v1074 = vadd.f32 0.0, %v1073
        %v1075 = vpop.f32.mrf.mxu0
        %1076 = vmatprep.mubr.bf16.mxu0 %v872
        %1077 = vmatmul.mubr.bf16.gmra.mxu0 %v703
        %v1078 = vpop.f32.mrf.mxu0
        %v1079 = vadd.f32 0.0, %v1078
        %v1080 = vpop.f32.mrf.mxu0
        %v1081 = vpop.f32.mrf.mxu0
        %v1082 = vadd.f32 0.0, %v1081
        %v1083 = vpop.f32.mrf.mxu0
        %1084 = vmatprep.mubr.bf16.mxu0 %v875
        %1085 = vmatmul.mubr.bf16.gmra.mxu0 %v705
        %v1086 = vpop.f32.mrf.mxu0
        %v1087 = vadd.f32 0.0, %v1086
        %v1088 = vpop.f32.mrf.mxu0
        %v1089 = vpop.f32.mrf.mxu0
        %v1090 = vadd.f32 0.0, %v1089
        %v1091 = vpop.f32.mrf.mxu0
        %1092 = vmatprep.mubr.bf16.mxu0 %v878
        %1093 = vmatmul.mubr.bf16.gmra.mxu0 %v707
        %v1094 = vpop.f32.mrf.mxu0
        %v1095 = vadd.f32 0.0, %v1094
        %v1096 = vpop.f32.mrf.mxu0
        %v1097 = vpop.f32.mrf.mxu0
        %v1098 = vadd.f32 0.0, %v1097
        %v1099 = vpop.f32.mrf.mxu0
        %1100 = vmatprep.mubr.bf16.mxu0 %v881
        %1101 = vmatmul.mubr.bf16.gmra.mxu0 %v709
        %v1102 = vpop.f32.mrf.mxu0
        %v1103 = vadd.f32 0.0, %v1102
        %v1104 = vpop.f32.mrf.mxu0
        %v1105 = vpop.f32.mrf.mxu0
        %v1106 = vadd.f32 0.0, %v1105
        %v1107 = vpop.f32.mrf.mxu0
        %1108 = vmatprep.mubr.bf16.mxu0 %v884
        %1109 = vmatmul.mubr.bf16.gmra.mxu0 %v711
        %v1110 = vpop.f32.mrf.mxu0
        %v1111 = vadd.f32 0.0, %v1110
        %v1112 = vpop.f32.mrf.mxu0
        %v1113 = vpop.f32.mrf.mxu0
        %v1114 = vadd.f32 0.0, %v1113
        %v1115 = vpop.f32.mrf.mxu0
        %1116 = vmatprep.mubr.bf16.mxu0 %v887
        %1117 = vmatmul.mubr.bf16.gmra.mxu0 %v713
        %v1118 = vpop.f32.mrf.mxu0
        %v1119 = vadd.f32 0.0, %v1118
        %v1120 = vpop.f32.mrf.mxu0
        %v1121 = vpop.f32.mrf.mxu0
        %v1122 = vadd.f32 0.0, %v1121
        %v1123 = vpop.f32.mrf.mxu0
        %1124 = vmatprep.mubr.bf16.mxu0 %v890
        %1125 = vmatmul.mubr.bf16.gmra.mxu0 %v715
        %v1126 = vpop.f32.mrf.mxu0
        %v1127 = vadd.f32 0.0, %v1126
        %v1128 = vpop.f32.mrf.mxu0
        %v1129 = vpop.f32.mrf.mxu0
        %v1130 = vadd.f32 0.0, %v1129
        %v1131 = vpop.f32.mrf.mxu0
        %1132 = vmatprep.mubr.bf16.mxu0 %v893
        %1133 = vmatmul.mubr.bf16.gmra.mxu0 %v717
        %v1134 = vpop.f32.mrf.mxu0
        %v1135 = vadd.f32 0.0, %v1134
        %v1136 = vpop.f32.mrf.mxu0
        %v1137 = vpop.f32.mrf.mxu0
        %v1138 = vadd.f32 0.0, %v1137
        %v1139 = vpop.f32.mrf.mxu0
        %1140 = vmatprep.mubr.bf16.mxu0 %v896
        %1141 = vmatmul.mubr.bf16.gmra.mxu0 %v719
        %v1142 = vpop.f32.mrf.mxu0
        %v1143 = vadd.f32 0.0, %v1142
        %v1144 = vpop.f32.mrf.mxu0
        %v1145 = vpop.f32.mrf.mxu0
        %v1146 = vadd.f32 0.0, %v1145
        %v1147 = vpop.f32.mrf.mxu0
        %1148 = vmatprep.mubr.bf16.mxu0 %v899
        %1149 = vmatmul.mubr.bf16.gmra.mxu0 %v721
        %v1150 = vpop.f32.mrf.mxu0
        %v1151 = vadd.f32 0.0, %v1150
        %v1152 = vpop.f32.mrf.mxu0
        %v1153 = vpop.f32.mrf.mxu0
        %v1154 = vadd.f32 0.0, %v1153
        %v1155 = vpop.f32.mrf.mxu0
        %1156 = vmatprep.mubr.bf16.mxu0 %v902
        %1157 = vmatmul.mubr.bf16.gmra.mxu0 %v723
        %v1158 = vpop.f32.mrf.mxu0
        %v1159 = vadd.f32 0.0, %v1158
        %v1160 = vpop.f32.mrf.mxu0
        %v1161 = vpop.f32.mrf.mxu0
        %v1162 = vadd.f32 0.0, %v1161
        %v1163 = vpop.f32.mrf.mxu0
        %1164 = vmatprep.mubr.bf16.mxu0 %v905
        %1165 = vmatmul.mubr.bf16.gmra.mxu0 %v725
        %v1166 = vpop.f32.mrf.mxu0
        %v1167 = vadd.f32 0.0, %v1166
        %v1168 = vpop.f32.mrf.mxu0
        %v1169 = vpop.f32.mrf.mxu0
        %v1170 = vadd.f32 0.0, %v1169
        %v1171 = vpop.f32.mrf.mxu0
        %1172 = vmatprep.mubr.bf16.mxu0 %v908
        %1173 = vmatmul.mubr.bf16.gmra.mxu0 %v727
        %v1174 = vpop.f32.mrf.mxu0
        %v1175 = vadd.f32 0.0, %v1174
        %v1176 = vpop.f32.mrf.mxu0
        %v1177 = vpop.f32.mrf.mxu0
        %v1178 = vadd.f32 0.0, %v1177
        %v1179 = vpop.f32.mrf.mxu0
        %1180 = vmatprep.mubr.bf16.mxu0 %v911
        %1181 = vmatmul.mubr.bf16.gmra.mxu0 %v729
        %v1182 = vpop.f32.mrf.mxu0
        %v1183 = vadd.f32 0.0, %v1182
        %v1184 = vpop.f32.mrf.mxu0
        %v1185 = vpop.f32.mrf.mxu0
        %v1186 = vadd.f32 0.0, %v1185
        %v1187 = vpop.f32.mrf.mxu0
        %1188 = vmatprep.mubr.bf16.mxu0 %v914
        %1189 = vmatmul.mubr.bf16.gmra.mxu0 %v731
        %v1190 = vpop.f32.mrf.mxu0
        %v1191 = vadd.f32 0.0, %v1190
        %v1192 = vpop.f32.mrf.mxu0
        %v1193 = vpop.f32.mrf.mxu0
        %v1194 = vadd.f32 0.0, %v1193
        %v1195 = vpop.f32.mrf.mxu0
        %1196 = vmatprep.mubr.bf16.mxu0 %v917
        %1197 = vmatmul.mubr.bf16.gmra.mxu0 %v733
        %v1198 = vpop.f32.mrf.mxu0
        %v1199 = vadd.f32 0.0, %v1198
        %v1200 = vpop.f32.mrf.mxu0
        %v1201 = vpop.f32.mrf.mxu0
        %v1202 = vadd.f32 0.0, %v1201
        %v1203 = vpop.f32.mrf.mxu0
        %1204 = vmatprep.mubr.bf16.mxu0 %v920
        %1205 = vmatmul.mubr.bf16.gmra.mxu0 %v735
        %v1206 = vpop.f32.mrf.mxu0
        %v1207 = vadd.f32 0.0, %v1206
        %v1208 = vpop.f32.mrf.mxu0
        %v1209 = vpop.f32.mrf.mxu0
        %v1210 = vadd.f32 0.0, %v1209
        %v1211 = vpop.f32.mrf.mxu0
        %1212 = vmatprep.mubr.bf16.mxu0 %v923
        %1213 = vmatmul.mubr.bf16.gmra.mxu0 %v737
        %v1214 = vpop.f32.mrf.mxu0
        %v1215 = vadd.f32 0.0, %v1214
        %v1216 = vpop.f32.mrf.mxu0
        %v1217 = vpop.f32.mrf.mxu0
        %v1218 = vadd.f32 0.0, %v1217
        %v1219 = vpop.f32.mrf.mxu0
        %1220 = vdwg.mxu0
        %v1221 = vadd.f32 %v336, %v967
        %v1222 = vadd.f32 %v337, %v970
        %v1223 = vadd.f32 %v338, %v975
        %v1224 = vadd.f32 %v339, %v978
        %v1225 = vadd.f32 %v340, %v983
        %v1226 = vadd.f32 %v341, %v986
        %v1227 = vadd.f32 %v342, %v991
        %v1228 = vadd.f32 %v343, %v994
        %v1229 = vadd.f32 %v344, %v999
        %v1230 = vadd.f32 %v345, %v1002
        %v1231 = vadd.f32 %v346, %v1007
        %v1232 = vadd.f32 %v347, %v1010
        %v1233 = vadd.f32 %v348, %v1015
        %v1234 = vadd.f32 %v349, %v1018
        %v1235 = vadd.f32 %v350, %v1023
        %v1236 = vadd.f32 %v351, %v1026
        %v1237 = vadd.f32 %v352, %v1031
        %v1238 = vadd.f32 %v353, %v1034
        %v1239 = vadd.f32 %v354, %v1039
        %v1240 = vadd.f32 %v355, %v1042
        %v1241 = vadd.f32 %v356, %v1047
        %v1242 = vadd.f32 %v357, %v1050
        %v1243 = vadd.f32 %v358, %v1055
        %v1244 = vadd.f32 %v359, %v1058
        %v1245 = vadd.f32 %v360, %v1063
        %v1246 = vadd.f32 %v361, %v1066
        %v1247 = vadd.f32 %v362, %v1071
        %v1248 = vadd.f32 %v363, %v1074
        %v1249 = vadd.f32 %v364, %v1079
        %v1250 = vadd.f32 %v365, %v1082
        %v1251 = vadd.f32 %v366, %v1087
        %v1252 = vadd.f32 %v367, %v1090
        %v1253 = vadd.f32 %v368, %v1095
        %v1254 = vadd.f32 %v369, %v1098
        %v1255 = vadd.f32 %v370, %v1103
        %v1256 = vadd.f32 %v371, %v1106
        %v1257 = vadd.f32 %v372, %v1111
        %v1258 = vadd.f32 %v373, %v1114
        %v1259 = vadd.f32 %v374, %v1119
        %v1260 = vadd.f32 %v375, %v1122
        %v1261 = vadd.f32 %v376, %v1127
        %v1262 = vadd.f32 %v377, %v1130
        %v1263 = vadd.f32 %v378, %v1135
        %v1264 = vadd.f32 %v379, %v1138
        %v1265 = vadd.f32 %v380, %v1143
        %v1266 = vadd.f32 %v381, %v1146
        %v1267 = vadd.f32 %v382, %v1151
        %v1268 = vadd.f32 %v383, %v1154
        %v1269 = vadd.f32 %v384, %v1159
        %v1270 = vadd.f32 %v385, %v1162
        %v1271 = vadd.f32 %v386, %v1167
        %v1272 = vadd.f32 %v387, %v1170
        %v1273 = vadd.f32 %v388, %v1175
        %v1274 = vadd.f32 %v389, %v1178
        %v1275 = vadd.f32 %v390, %v1183
        %v1276 = vadd.f32 %v391, %v1186
        %v1277 = vadd.f32 %v392, %v1191
        %v1278 = vadd.f32 %v393, %v1194
        %v1279 = vadd.f32 %v394, %v1199
        %v1280 = vadd.f32 %v395, %v1202
        %v1281 = vadd.f32 %v396, %v1207
        %v1282 = vadd.f32 %v397, %v1210
        %v1283 = vadd.f32 %v398, %v1215
        %v1284 = vadd.f32 %v399, %v1218
        %vm1285 = vcmask 523264
        %1286 = vst.msk [vmem:[#allocation2] sm:$0xff] %vm1285, %v1221
        %1287 = vst.msk [vmem:[#allocation2 + $0x8] sm:$0xff] %vm1285, %v1222
        %1288 = vst.msk [vmem:[#allocation2 + $0x10] sm:$0xff] %vm1285, %v1223
        %1289 = vst.msk [vmem:[#allocation2 + $0x18] sm:$0xff] %vm1285, %v1224
        %1290 = vst.msk [vmem:[#allocation2 + $0x20] sm:$0xff] %vm1285, %v1225
        %1291 = vst.msk [vmem:[#allocation2 + $0x28] sm:$0xff] %vm1285, %v1226
        %1292 = vst.msk [vmem:[#allocation2 + $0x30] sm:$0xff] %vm1285, %v1227
        %1293 = vst.msk [vmem:[#allocation2 + $0x38] sm:$0xff] %vm1285, %v1228
        %1294 = vst.msk [vmem:[#allocation2 + $0x40] sm:$0xff] %vm1285, %v1229
        %1295 = vst.msk [vmem:[#allocation2 + $0x48] sm:$0xff] %vm1285, %v1230
        %1296 = vst.msk [vmem:[#allocation2 + $0x50] sm:$0xff] %vm1285, %v1231
        %1297 = vst.msk [vmem:[#allocation2 + $0x58] sm:$0xff] %vm1285, %v1232
        %1298 = vst.msk [vmem:[#allocation2 + $0x60] sm:$0xff] %vm1285, %v1233
        %1299 = vst.msk [vmem:[#allocation2 + $0x68] sm:$0xff] %vm1285, %v1234
        %1300 = vst.msk [vmem:[#allocation2 + $0x70] sm:$0xff] %vm1285, %v1235
        %1301 = vst.msk [vmem:[#allocation2 + $0x78] sm:$0xff] %vm1285, %v1236
        %1302 = vst.msk [vmem:[#allocation2 + $0x80] sm:$0xff] %vm1285, %v1237
        %1303 = vst.msk [vmem:[#allocation2 + $0x88] sm:$0xff] %vm1285, %v1238
        %1304 = vst.msk [vmem:[#allocation2 + $0x90] sm:$0xff] %vm1285, %v1239
        %1305 = vst.msk [vmem:[#allocation2 + $0x98] sm:$0xff] %vm1285, %v1240
        %1306 = vst.msk [vmem:[#allocation2 + $0xa0] sm:$0xff] %vm1285, %v1241
        %1307 = vst.msk [vmem:[#allocation2 + $0xa8] sm:$0xff] %vm1285, %v1242
        %1308 = vst.msk [vmem:[#allocation2 + $0xb0] sm:$0xff] %vm1285, %v1243
        %1309 = vst.msk [vmem:[#allocation2 + $0xb8] sm:$0xff] %vm1285, %v1244
        %1310 = vst.msk [vmem:[#allocation2 + $0xc0] sm:$0xff] %vm1285, %v1245
        %1311 = vst.msk [vmem:[#allocation2 + $0xc8] sm:$0xff] %vm1285, %v1246
        %1312 = vst.msk [vmem:[#allocation2 + $0xd0] sm:$0xff] %vm1285, %v1247
        %1313 = vst.msk [vmem:[#allocation2 + $0xd8] sm:$0xff] %vm1285, %v1248
        %1314 = vst.msk [vmem:[#allocation2 + $0xe0] sm:$0xff] %vm1285, %v1249
        %1315 = vst.msk [vmem:[#allocation2 + $0xe8] sm:$0xff] %vm1285, %v1250
        %1316 = vst.msk [vmem:[#allocation2 + $0xf0] sm:$0xff] %vm1285, %v1251
        %1317 = vst.msk [vmem:[#allocation2 + $0xf8] sm:$0xff] %vm1285, %v1252
        %1318 = vst.msk [vmem:[#allocation2 + $0x100] sm:$0xff] %vm1285, %v1253
        %1319 = vst.msk [vmem:[#allocation2 + $0x108] sm:$0xff] %vm1285, %v1254
        %1320 = vst.msk [vmem:[#allocation2 + $0x110] sm:$0xff] %vm1285, %v1255
        %1321 = vst.msk [vmem:[#allocation2 + $0x118] sm:$0xff] %vm1285, %v1256
        %1322 = vst.msk [vmem:[#allocation2 + $0x120] sm:$0xff] %vm1285, %v1257
        %1323 = vst.msk [vmem:[#allocation2 + $0x128] sm:$0xff] %vm1285, %v1258
        %1324 = vst.msk [vmem:[#allocation2 + $0x130] sm:$0xff] %vm1285, %v1259
        %1325 = vst.msk [vmem:[#allocation2 + $0x138] sm:$0xff] %vm1285, %v1260
        %1326 = vst.msk [vmem:[#allocation2 + $0x140] sm:$0xff] %vm1285, %v1261
        %1327 = vst.msk [vmem:[#allocation2 + $0x148] sm:$0xff] %vm1285, %v1262
        %1328 = vst.msk [vmem:[#allocation2 + $0x150] sm:$0xff] %vm1285, %v1263
        %1329 = vst.msk [vmem:[#allocation2 + $0x158] sm:$0xff] %vm1285, %v1264
        %1330 = vst.msk [vmem:[#allocation2 + $0x160] sm:$0xff] %vm1285, %v1265
        %1331 = vst.msk [vmem:[#allocation2 + $0x168] sm:$0xff] %vm1285, %v1266
        %1332 = vst.msk [vmem:[#allocation2 + $0x170] sm:$0xff] %vm1285, %v1267
        %1333 = vst.msk [vmem:[#allocation2 + $0x178] sm:$0xff] %vm1285, %v1268
        %1334 = vst.msk [vmem:[#allocation2 + $0x180] sm:$0xff] %vm1285, %v1269
        %1335 = vst.msk [vmem:[#allocation2 + $0x188] sm:$0xff] %vm1285, %v1270
        %1336 = vst.msk [vmem:[#allocation2 + $0x190] sm:$0xff] %vm1285, %v1271
        %1337 = vst.msk [vmem:[#allocation2 + $0x198] sm:$0xff] %vm1285, %v1272
        %1338 = vst.msk [vmem:[#allocation2 + $0x1a0] sm:$0xff] %vm1285, %v1273
        %1339 = vst.msk [vmem:[#allocation2 + $0x1a8] sm:$0xff] %vm1285, %v1274
        %1340 = vst.msk [vmem:[#allocation2 + $0x1b0] sm:$0xff] %vm1285, %v1275
        %1341 = vst.msk [vmem:[#allocation2 + $0x1b8] sm:$0xff] %vm1285, %v1276
        %1342 = vst.msk [vmem:[#allocation2 + $0x1c0] sm:$0xff] %vm1285, %v1277
        %1343 = vst.msk [vmem:[#allocation2 + $0x1c8] sm:$0xff] %vm1285, %v1278
        %1344 = vst.msk [vmem:[#allocation2 + $0x1d0] sm:$0xff] %vm1285, %v1279
        %1345 = vst.msk [vmem:[#allocation2 + $0x1d8] sm:$0xff] %vm1285, %v1280
        %1346 = vst.msk [vmem:[#allocation2 + $0x1e0] sm:$0xff] %vm1285, %v1281
        %1347 = vst.msk [vmem:[#allocation2 + $0x1e8] sm:$0xff] %vm1285, %v1282
        %1348 = vst.msk [vmem:[#allocation2 + $0x1f0] sm:$0xff] %vm1285, %v1283
        %1349 = vst.msk [vmem:[#allocation2 + $0x1f8] sm:$0xff] %vm1285, %v1284
        // Predicated region
        $region33: #{tpu_custom_call.1} parent=27 // pred_check
          %p1350 = pneg %p267
        $region34: #{tpu_custom_call.1} parent=27 // pred_check_branch
          %1352 = sbr.rel (%p1350) target = $region36
        $region35: #{tpu_custom_call.1} parent=27 // pred_region
          %v1353 = vld [vmem:[#allocation2] sm:$0xff]
          %v1354 = vld [vmem:[#allocation2 + $0x8] sm:$0xff]
          %v1355 = vld [vmem:[#allocation2 + $0x10] sm:$0xff]
          %v1356 = vld [vmem:[#allocation2 + $0x18] sm:$0xff]
          %v1357 = vld [vmem:[#allocation2 + $0x20] sm:$0xff]
          %v1358 = vld [vmem:[#allocation2 + $0x28] sm:$0xff]
          %v1359 = vld [vmem:[#allocation2 + $0x30] sm:$0xff]
          %v1360 = vld [vmem:[#allocation2 + $0x38] sm:$0xff]
          %v1361 = vld [vmem:[#allocation2 + $0x40] sm:$0xff]
          %v1362 = vld [vmem:[#allocation2 + $0x48] sm:$0xff]
          %v1363 = vld [vmem:[#allocation2 + $0x50] sm:$0xff]
          %v1364 = vld [vmem:[#allocation2 + $0x58] sm:$0xff]
          %v1365 = vld [vmem:[#allocation2 + $0x60] sm:$0xff]
          %v1366 = vld [vmem:[#allocation2 + $0x68] sm:$0xff]
          %v1367 = vld [vmem:[#allocation2 + $0x70] sm:$0xff]
          %v1368 = vld [vmem:[#allocation2 + $0x78] sm:$0xff]
          %v1369 = vld [vmem:[#allocation2 + $0x80] sm:$0xff]
          %v1370 = vld [vmem:[#allocation2 + $0x88] sm:$0xff]
          %v1371 = vld [vmem:[#allocation2 + $0x90] sm:$0xff]
          %v1372 = vld [vmem:[#allocation2 + $0x98] sm:$0xff]
          %v1373 = vld [vmem:[#allocation2 + $0xa0] sm:$0xff]
          %v1374 = vld [vmem:[#allocation2 + $0xa8] sm:$0xff]
          %v1375 = vld [vmem:[#allocation2 + $0xb0] sm:$0xff]
          %v1376 = vld [vmem:[#allocation2 + $0xb8] sm:$0xff]
          %v1377 = vld [vmem:[#allocation2 + $0xc0] sm:$0xff]
          %v1378 = vld [vmem:[#allocation2 + $0xc8] sm:$0xff]
          %v1379 = vld [vmem:[#allocation2 + $0xd0] sm:$0xff]
          %v1380 = vld [vmem:[#allocation2 + $0xd8] sm:$0xff]
          %v1381 = vld [vmem:[#allocation2 + $0xe0] sm:$0xff]
          %v1382 = vld [vmem:[#allocation2 + $0xe8] sm:$0xff]
          %v1383 = vld [vmem:[#allocation2 + $0xf0] sm:$0xff]
          %v1384 = vld [vmem:[#allocation2 + $0xf8] sm:$0xff]
          %v1385 = vld [vmem:[#allocation2 + $0x100] sm:$0xff]
          %v1386 = vld [vmem:[#allocation2 + $0x108] sm:$0xff]
          %v1387 = vld [vmem:[#allocation2 + $0x110] sm:$0xff]
          %v1388 = vld [vmem:[#allocation2 + $0x118] sm:$0xff]
          %v1389 = vld [vmem:[#allocation2 + $0x120] sm:$0xff]
          %v1390 = vld [vmem:[#allocation2 + $0x128] sm:$0xff]
          %v1391 = vld [vmem:[#allocation2 + $0x130] sm:$0xff]
          %v1392 = vld [vmem:[#allocation2 + $0x138] sm:$0xff]
          %v1393 = vld [vmem:[#allocation2 + $0x140] sm:$0xff]
          %v1394 = vld [vmem:[#allocation2 + $0x148] sm:$0xff]
          %v1395 = vld [vmem:[#allocation2 + $0x150] sm:$0xff]
          %v1396 = vld [vmem:[#allocation2 + $0x158] sm:$0xff]
          %v1397 = vld [vmem:[#allocation2 + $0x160] sm:$0xff]
          %v1398 = vld [vmem:[#allocation2 + $0x168] sm:$0xff]
          %v1399 = vld [vmem:[#allocation2 + $0x170] sm:$0xff]
          %v1400 = vld [vmem:[#allocation2 + $0x178] sm:$0xff]
          %v1401 = vld [vmem:[#allocation2 + $0x180] sm:$0xff]
          %v1402 = vld [vmem:[#allocation2 + $0x188] sm:$0xff]
          %v1403 = vld [vmem:[#allocation2 + $0x190] sm:$0xff]
          %v1404 = vld [vmem:[#allocation2 + $0x198] sm:$0xff]
          %v1405 = vld [vmem:[#allocation2 + $0x1a0] sm:$0xff]
          %v1406 = vld [vmem:[#allocation2 + $0x1a8] sm:$0xff]
          %v1407 = vld [vmem:[#allocation2 + $0x1b0] sm:$0xff]
          %v1408 = vld [vmem:[#allocation2 + $0x1b8] sm:$0xff]
          %v1409 = vld [vmem:[#allocation2 + $0x1c0] sm:$0xff]
          %v1410 = vld [vmem:[#allocation2 + $0x1c8] sm:$0xff]
          %v1411 = vld [vmem:[#allocation2 + $0x1d0] sm:$0xff]
          %v1412 = vld [vmem:[#allocation2 + $0x1d8] sm:$0xff]
          %v1413 = vld [vmem:[#allocation2 + $0x1e0] sm:$0xff]
          %v1414 = vld [vmem:[#allocation2 + $0x1e8] sm:$0xff]
          %v1415 = vld [vmem:[#allocation2 + $0x1f0] sm:$0xff]
          %v1416 = vld [vmem:[#allocation2 + $0x1f8] sm:$0xff]
          %v1417 = vpack.c.bf16 %v1354, %v1353
          %v1418 = vpack.c.bf16 %v1356, %v1355
          %v1419 = vpack.c.bf16 %v1358, %v1357
          %v1420 = vpack.c.bf16 %v1360, %v1359
          %v1421 = vpack.c.bf16 %v1362, %v1361
          %v1422 = vpack.c.bf16 %v1364, %v1363
          %v1423 = vpack.c.bf16 %v1366, %v1365
          %v1424 = vpack.c.bf16 %v1368, %v1367
          %v1425 = vpack.c.bf16 %v1370, %v1369
          %v1426 = vpack.c.bf16 %v1372, %v1371
          %v1427 = vpack.c.bf16 %v1374, %v1373
          %v1428 = vpack.c.bf16 %v1376, %v1375
          %v1429 = vpack.c.bf16 %v1378, %v1377
          %v1430 = vpack.c.bf16 %v1380, %v1379
          %v1431 = vpack.c.bf16 %v1382, %v1381
          %v1432 = vpack.c.bf16 %v1384, %v1383
          %v1433 = vpack.c.bf16 %v1386, %v1385
          %v1434 = vpack.c.bf16 %v1388, %v1387
          %v1435 = vpack.c.bf16 %v1390, %v1389
          %v1436 = vpack.c.bf16 %v1392, %v1391
          %v1437 = vpack.c.bf16 %v1394, %v1393
          %v1438 = vpack.c.bf16 %v1396, %v1395
          %v1439 = vpack.c.bf16 %v1398, %v1397
          %v1440 = vpack.c.bf16 %v1400, %v1399
          %v1441 = vpack.c.bf16 %v1402, %v1401
          %v1442 = vpack.c.bf16 %v1404, %v1403
          %v1443 = vpack.c.bf16 %v1406, %v1405
          %v1444 = vpack.c.bf16 %v1408, %v1407
          %v1445 = vpack.c.bf16 %v1410, %v1409
          %v1446 = vpack.c.bf16 %v1412, %v1411
          %v1447 = vpack.c.bf16 %v1414, %v1413
          %v1448 = vpack.c.bf16 %v1416, %v1415
          %v1481 = vunpack.c.l.b16 %v1417
          %v1482 = vunpack.c.h.b16 %v1417
          %v1483 = vunpack.c.l.b16 %v1418
          %v1484 = vunpack.c.h.b16 %v1418
          %v1485 = vunpack.c.l.b16 %v1419
          %v1486 = vunpack.c.h.b16 %v1419
          %v1487 = vunpack.c.l.b16 %v1420
          %v1488 = vunpack.c.h.b16 %v1420
          %v1489 = vunpack.c.l.b16 %v1421
          %v1490 = vunpack.c.h.b16 %v1421
          %v1491 = vunpack.c.l.b16 %v1422
          %v1492 = vunpack.c.h.b16 %v1422
          %v1493 = vunpack.c.l.b16 %v1423
          %v1494 = vunpack.c.h.b16 %v1423
          %v1495 = vunpack.c.l.b16 %v1424
          %v1496 = vunpack.c.h.b16 %v1424
          %v1497 = vunpack.c.l.b16 %v1425
          %v1498 = vunpack.c.h.b16 %v1425
          %v1499 = vunpack.c.l.b16 %v1426
          %v1500 = vunpack.c.h.b16 %v1426
          %v1501 = vunpack.c.l.b16 %v1427
          %v1502 = vunpack.c.h.b16 %v1427
          %v1503 = vunpack.c.l.b16 %v1428
          %v1504 = vunpack.c.h.b16 %v1428
          %v1505 = vunpack.c.l.b16 %v1429
          %v1506 = vunpack.c.h.b16 %v1429
          %v1507 = vunpack.c.l.b16 %v1430
          %v1508 = vunpack.c.h.b16 %v1430
          %v1509 = vunpack.c.l.b16 %v1431
          %v1510 = vunpack.c.h.b16 %v1431
          %v1511 = vunpack.c.l.b16 %v1432
          %v1512 = vunpack.c.h.b16 %v1432
          %v1513 = vunpack.c.l.b16 %v1433
          %v1514 = vunpack.c.h.b16 %v1433
          %v1515 = vunpack.c.l.b16 %v1434
          %v1516 = vunpack.c.h.b16 %v1434
          %v1517 = vunpack.c.l.b16 %v1435
          %v1518 = vunpack.c.h.b16 %v1435
          %v1519 = vunpack.c.l.b16 %v1436
          %v1520 = vunpack.c.h.b16 %v1436
          %v1521 = vunpack.c.l.b16 %v1437
          %v1522 = vunpack.c.h.b16 %v1437
          %v1523 = vunpack.c.l.b16 %v1438
          %v1524 = vunpack.c.h.b16 %v1438
          %v1525 = vunpack.c.l.b16 %v1439
          %v1526 = vunpack.c.h.b16 %v1439
          %v1527 = vunpack.c.l.b16 %v1440
          %v1528 = vunpack.c.h.b16 %v1440
          %v1529 = vunpack.c.l.b16 %v1441
          %v1530 = vunpack.c.h.b16 %v1441
          %v1531 = vunpack.c.l.b16 %v1442
          %v1532 = vunpack.c.h.b16 %v1442
          %v1533 = vunpack.c.l.b16 %v1443
          %v1534 = vunpack.c.h.b16 %v1443
          %v1535 = vunpack.c.l.b16 %v1444
          %v1536 = vunpack.c.h.b16 %v1444
          %v1537 = vunpack.c.l.b16 %v1445
          %v1538 = vunpack.c.h.b16 %v1445
          %v1539 = vunpack.c.l.b16 %v1446
          %v1540 = vunpack.c.h.b16 %v1446
          %v1541 = vunpack.c.l.b16 %v1447
          %v1542 = vunpack.c.h.b16 %v1447
          %v1543 = vunpack.c.l.b16 %v1448
          %v1544 = vunpack.c.h.b16 %v1448
          %v1545 = vpack.c.b16 %v1481, %v1481
          %v1546 = vpack.c.b16 %v1482, %v1482
          %v1547 = vpack.c.b16 %v1483, %v1483
          %v1548 = vpack.c.b16 %v1484, %v1484
          %v1549 = vpack.c.b16 %v1485, %v1485
          %v1550 = vpack.c.b16 %v1486, %v1486
          %v1551 = vpack.c.b16 %v1487, %v1487
          %v1552 = vpack.c.b16 %v1488, %v1488
          %v1553 = vpack.c.b16 %v1489, %v1489
          %v1554 = vpack.c.b16 %v1490, %v1490
          %v1555 = vpack.c.b16 %v1491, %v1491
          %v1556 = vpack.c.b16 %v1492, %v1492
          %v1557 = vpack.c.b16 %v1493, %v1493
          %v1558 = vpack.c.b16 %v1494, %v1494
          %v1559 = vpack.c.b16 %v1495, %v1495
          %v1560 = vpack.c.b16 %v1496, %v1496
          %v1561 = vpack.c.b16 %v1497, %v1497
          %v1562 = vpack.c.b16 %v1498, %v1498
          %v1563 = vpack.c.b16 %v1499, %v1499
          %v1564 = vpack.c.b16 %v1500, %v1500
          %v1565 = vpack.c.b16 %v1501, %v1501
          %v1566 = vpack.c.b16 %v1502, %v1502
          %v1567 = vpack.c.b16 %v1503, %v1503
          %v1568 = vpack.c.b16 %v1504, %v1504
          %v1569 = vpack.c.b16 %v1505, %v1505
          %v1570 = vpack.c.b16 %v1506, %v1506
          %v1571 = vpack.c.b16 %v1507, %v1507
          %v1572 = vpack.c.b16 %v1508, %v1508
          %v1573 = vpack.c.b16 %v1509, %v1509
          %v1574 = vpack.c.b16 %v1510, %v1510
          %v1575 = vpack.c.b16 %v1511, %v1511
          %v1576 = vpack.c.b16 %v1512, %v1512
          %v1577 = vpack.c.b16 %v1513, %v1513
          %v1578 = vpack.c.b16 %v1514, %v1514
          %v1579 = vpack.c.b16 %v1515, %v1515
          %v1580 = vpack.c.b16 %v1516, %v1516
          %v1581 = vpack.c.b16 %v1517, %v1517
          %v1582 = vpack.c.b16 %v1518, %v1518
          %v1583 = vpack.c.b16 %v1519, %v1519
          %v1584 = vpack.c.b16 %v1520, %v1520
          %v1585 = vpack.c.b16 %v1521, %v1521
          %v1586 = vpack.c.b16 %v1522, %v1522
          %v1587 = vpack.c.b16 %v1523, %v1523
          %v1588 = vpack.c.b16 %v1524, %v1524
          %v1589 = vpack.c.b16 %v1525, %v1525
          %v1590 = vpack.c.b16 %v1526, %v1526
          %v1591 = vpack.c.b16 %v1527, %v1527
          %v1592 = vpack.c.b16 %v1528, %v1528
          %v1593 = vpack.c.b16 %v1529, %v1529
          %v1594 = vpack.c.b16 %v1530, %v1530
          %v1595 = vpack.c.b16 %v1531, %v1531
          %v1596 = vpack.c.b16 %v1532, %v1532
          %v1597 = vpack.c.b16 %v1533, %v1533
          %v1598 = vpack.c.b16 %v1534, %v1534
          %v1599 = vpack.c.b16 %v1535, %v1535
          %v1600 = vpack.c.b16 %v1536, %v1536
          %v1601 = vpack.c.b16 %v1537, %v1537
          %v1602 = vpack.c.b16 %v1538, %v1538
          %v1603 = vpack.c.b16 %v1539, %v1539
          %v1604 = vpack.c.b16 %v1540, %v1540
          %v1605 = vpack.c.b16 %v1541, %v1541
          %v1606 = vpack.c.b16 %v1542, %v1542
          %v1607 = vpack.c.b16 %v1543, %v1543
          %v1608 = vpack.c.b16 %v1544, %v1544
          %vm1673 = vcmask 519168
          %1674 = vst.msk [vmem:[%s264] sm:$0xf] %vm1673, %v1545
          %1675 = vst.msk [vmem:[%s264 + $0x4] sm:$0xf] %vm1673, %v1546
          %1676 = vst.msk [vmem:[%s264 + $0x8] sm:$0xf] %vm1673, %v1547
          %1677 = vst.msk [vmem:[%s264 + $0xc] sm:$0xf] %vm1673, %v1548
          %1678 = vst.msk [vmem:[%s264 + $0x10] sm:$0xf] %vm1673, %v1549
          %1679 = vst.msk [vmem:[%s264 + $0x14] sm:$0xf] %vm1673, %v1550
          %1680 = vst.msk [vmem:[%s264 + $0x18] sm:$0xf] %vm1673, %v1551
          %1681 = vst.msk [vmem:[%s264 + $0x1c] sm:$0xf] %vm1673, %v1552
          %1682 = vst.msk [vmem:[%s264 + $0x20] sm:$0xf] %vm1673, %v1553
          %1683 = vst.msk [vmem:[%s264 + $0x24] sm:$0xf] %vm1673, %v1554
          %1684 = vst.msk [vmem:[%s264 + $0x28] sm:$0xf] %vm1673, %v1555
          %1685 = vst.msk [vmem:[%s264 + $0x2c] sm:$0xf] %vm1673, %v1556
          %1686 = vst.msk [vmem:[%s264 + $0x30] sm:$0xf] %vm1673, %v1557
          %1687 = vst.msk [vmem:[%s264 + $0x34] sm:$0xf] %vm1673, %v1558
          %1688 = vst.msk [vmem:[%s264 + $0x38] sm:$0xf] %vm1673, %v1559
          %1689 = vst.msk [vmem:[%s264 + $0x3c] sm:$0xf] %vm1673, %v1560
          %1690 = vst.msk [vmem:[%s264 + $0x40] sm:$0xf] %vm1673, %v1561
          %1691 = vst.msk [vmem:[%s264 + $0x44] sm:$0xf] %vm1673, %v1562
          %1692 = vst.msk [vmem:[%s264 + $0x48] sm:$0xf] %vm1673, %v1563
          %1693 = vst.msk [vmem:[%s264 + $0x4c] sm:$0xf] %vm1673, %v1564
          %1694 = vst.msk [vmem:[%s264 + $0x50] sm:$0xf] %vm1673, %v1565
          %1695 = vst.msk [vmem:[%s264 + $0x54] sm:$0xf] %vm1673, %v1566
          %1696 = vst.msk [vmem:[%s264 + $0x58] sm:$0xf] %vm1673, %v1567
          %1697 = vst.msk [vmem:[%s264 + $0x5c] sm:$0xf] %vm1673, %v1568
          %1698 = vst.msk [vmem:[%s264 + $0x60] sm:$0xf] %vm1673, %v1569
          %1699 = vst.msk [vmem:[%s264 + $0x64] sm:$0xf] %vm1673, %v1570
          %1700 = vst.msk [vmem:[%s264 + $0x68] sm:$0xf] %vm1673, %v1571
          %1701 = vst.msk [vmem:[%s264 + $0x6c] sm:$0xf] %vm1673, %v1572
          %1702 = vst.msk [vmem:[%s264 + $0x70] sm:$0xf] %vm1673, %v1573
          %1703 = vst.msk [vmem:[%s264 + $0x74] sm:$0xf] %vm1673, %v1574
          %1704 = vst.msk [vmem:[%s264 + $0x78] sm:$0xf] %vm1673, %v1575
          %1705 = vst.msk [vmem:[%s264 + $0x7c] sm:$0xf] %vm1673, %v1576
          %1706 = vst.msk [vmem:[%s264 + $0x80] sm:$0xf] %vm1673, %v1577
          %1707 = vst.msk [vmem:[%s264 + $0x84] sm:$0xf] %vm1673, %v1578
          %1708 = vst.msk [vmem:[%s264 + $0x88] sm:$0xf] %vm1673, %v1579
          %1709 = vst.msk [vmem:[%s264 + $0x8c] sm:$0xf] %vm1673, %v1580
          %1710 = vst.msk [vmem:[%s264 + $0x90] sm:$0xf] %vm1673, %v1581
          %1711 = vst.msk [vmem:[%s264 + $0x94] sm:$0xf] %vm1673, %v1582
          %1712 = vst.msk [vmem:[%s264 + $0x98] sm:$0xf] %vm1673, %v1583
          %1713 = vst.msk [vmem:[%s264 + $0x9c] sm:$0xf] %vm1673, %v1584
          %1714 = vst.msk [vmem:[%s264 + $0xa0] sm:$0xf] %vm1673, %v1585
          %1715 = vst.msk [vmem:[%s264 + $0xa4] sm:$0xf] %vm1673, %v1586
          %1716 = vst.msk [vmem:[%s264 + $0xa8] sm:$0xf] %vm1673, %v1587
          %1717 = vst.msk [vmem:[%s264 + $0xac] sm:$0xf] %vm1673, %v1588
          %1718 = vst.msk [vmem:[%s264 + $0xb0] sm:$0xf] %vm1673, %v1589
          %1719 = vst.msk [vmem:[%s264 + $0xb4] sm:$0xf] %vm1673, %v1590
          %1720 = vst.msk [vmem:[%s264 + $0xb8] sm:$0xf] %vm1673, %v1591
          %1721 = vst.msk [vmem:[%s264 + $0xbc] sm:$0xf] %vm1673, %v1592
          %1722 = vst.msk [vmem:[%s264 + $0xc0] sm:$0xf] %vm1673, %v1593
          %1723 = vst.msk [vmem:[%s264 + $0xc4] sm:$0xf] %vm1673, %v1594
          %1724 = vst.msk [vmem:[%s264 + $0xc8] sm:$0xf] %vm1673, %v1595
          %1725 = vst.msk [vmem:[%s264 + $0xcc] sm:$0xf] %vm1673, %v1596
          %1726 = vst.msk [vmem:[%s264 + $0xd0] sm:$0xf] %vm1673, %v1597
          %1727 = vst.msk [vmem:[%s264 + $0xd4] sm:$0xf] %vm1673, %v1598
          %1728 = vst.msk [vmem:[%s264 + $0xd8] sm:$0xf] %vm1673, %v1599
          %1729 = vst.msk [vmem:[%s264 + $0xdc] sm:$0xf] %vm1673, %v1600
          %1730 = vst.msk [vmem:[%s264 + $0xe0] sm:$0xf] %vm1673, %v1601
          %1731 = vst.msk [vmem:[%s264 + $0xe4] sm:$0xf] %vm1673, %v1602
          %1732 = vst.msk [vmem:[%s264 + $0xe8] sm:$0xf] %vm1673, %v1603
          %1733 = vst.msk [vmem:[%s264 + $0xec] sm:$0xf] %vm1673, %v1604
          %1734 = vst.msk [vmem:[%s264 + $0xf0] sm:$0xf] %vm1673, %v1605
          %1735 = vst.msk [vmem:[%s264 + $0xf4] sm:$0xf] %vm1673, %v1606
          %1736 = vst.msk [vmem:[%s264 + $0xf8] sm:$0xf] %vm1673, %v1607
          %1737 = vst.msk [vmem:[%s264 + $0xfc] sm:$0xf] %vm1673, %v1608
          %v1738 = vsel %vm1285, %v1353, 0.0
          %v1739 = vsel %vm1285, %v1354, 0.0
          %v1740 = vadd.f32 %v1738, %v1739
          %v1741 = vsel %vm1285, %v1355, 0.0
          %v1742 = vadd.f32 %v1740, %v1741
          %v1743 = vsel %vm1285, %v1356, 0.0
          %v1744 = vadd.f32 %v1742, %v1743
          %v1745 = vsel %vm1285, %v1357, 0.0
          %v1746 = vadd.f32 %v1744, %v1745
          %v1747 = vsel %vm1285, %v1358, 0.0
          %v1748 = vadd.f32 %v1746, %v1747
          %v1749 = vsel %vm1285, %v1359, 0.0
          %v1750 = vadd.f32 %v1748, %v1749
          %v1751 = vsel %vm1285, %v1360, 0.0
          %v1752 = vadd.f32 %v1750, %v1751
          %v1753 = vsel %vm1285, %v1361, 0.0
          %v1754 = vadd.f32 %v1752, %v1753
          %v1755 = vsel %vm1285, %v1362, 0.0
          %v1756 = vadd.f32 %v1754, %v1755
          %v1757 = vsel %vm1285, %v1363, 0.0
          %v1758 = vadd.f32 %v1756, %v1757
          %v1759 = vsel %vm1285, %v1364, 0.0
          %v1760 = vadd.f32 %v1758, %v1759
          %v1761 = vsel %vm1285, %v1365, 0.0
          %v1762 = vadd.f32 %v1760, %v1761
          %v1763 = vsel %vm1285, %v1366, 0.0
          %v1764 = vadd.f32 %v1762, %v1763
          %v1765 = vsel %vm1285, %v1367, 0.0
          %v1766 = vadd.f32 %v1764, %v1765
          %v1767 = vsel %vm1285, %v1368, 0.0
          %v1768 = vadd.f32 %v1766, %v1767
          %v1769 = vsel %vm1285, %v1369, 0.0
          %v1770 = vadd.f32 %v1768, %v1769
          %v1771 = vsel %vm1285, %v1370, 0.0
          %v1772 = vadd.f32 %v1770, %v1771
          %v1773 = vsel %vm1285, %v1371, 0.0
          %v1774 = vadd.f32 %v1772, %v1773
          %v1775 = vsel %vm1285, %v1372, 0.0
          %v1776 = vadd.f32 %v1774, %v1775
          %v1777 = vsel %vm1285, %v1373, 0.0
          %v1778 = vadd.f32 %v1776, %v1777
          %v1779 = vsel %vm1285, %v1374, 0.0
          %v1780 = vadd.f32 %v1778, %v1779
          %v1781 = vsel %vm1285, %v1375, 0.0
          %v1782 = vadd.f32 %v1780, %v1781
          %v1783 = vsel %vm1285, %v1376, 0.0
          %v1784 = vadd.f32 %v1782, %v1783
          %v1785 = vsel %vm1285, %v1377, 0.0
          %v1786 = vadd.f32 %v1784, %v1785
          %v1787 = vsel %vm1285, %v1378, 0.0
          %v1788 = vadd.f32 %v1786, %v1787
          %v1789 = vsel %vm1285, %v1379, 0.0
          %v1790 = vadd.f32 %v1788, %v1789
          %v1791 = vsel %vm1285, %v1380, 0.0
          %v1792 = vadd.f32 %v1790, %v1791
          %v1793 = vsel %vm1285, %v1381, 0.0
          %v1794 = vadd.f32 %v1792, %v1793
          %v1795 = vsel %vm1285, %v1382, 0.0
          %v1796 = vadd.f32 %v1794, %v1795
          %v1797 = vsel %vm1285, %v1383, 0.0
          %v1798 = vadd.f32 %v1796, %v1797
          %v1799 = vsel %vm1285, %v1384, 0.0
          %v1800 = vadd.f32 %v1798, %v1799
          %v1801 = vsel %vm1285, %v1385, 0.0
          %v1802 = vadd.f32 %v1800, %v1801
          %v1803 = vsel %vm1285, %v1386, 0.0
          %v1804 = vadd.f32 %v1802, %v1803
          %v1805 = vsel %vm1285, %v1387, 0.0
          %v1806 = vadd.f32 %v1804, %v1805
          %v1807 = vsel %vm1285, %v1388, 0.0
          %v1808 = vadd.f32 %v1806, %v1807
          %v1809 = vsel %vm1285, %v1389, 0.0
          %v1810 = vadd.f32 %v1808, %v1809
          %v1811 = vsel %vm1285, %v1390, 0.0
          %v1812 = vadd.f32 %v1810, %v1811
          %v1813 = vsel %vm1285, %v1391, 0.0
          %v1814 = vadd.f32 %v1812, %v1813
          %v1815 = vsel %vm1285, %v1392, 0.0
          %v1816 = vadd.f32 %v1814, %v1815
          %v1817 = vsel %vm1285, %v1393, 0.0
          %v1818 = vadd.f32 %v1816, %v1817
          %v1819 = vsel %vm1285, %v1394, 0.0
          %v1820 = vadd.f32 %v1818, %v1819
          %v1821 = vsel %vm1285, %v1395, 0.0
          %v1822 = vadd.f32 %v1820, %v1821
          %v1823 = vsel %vm1285, %v1396, 0.0
          %v1824 = vadd.f32 %v1822, %v1823
          %v1825 = vsel %vm1285, %v1397, 0.0
          %v1826 = vadd.f32 %v1824, %v1825
          %v1827 = vsel %vm1285, %v1398, 0.0
          %v1828 = vadd.f32 %v1826, %v1827
          %v1829 = vsel %vm1285, %v1399, 0.0
          %v1830 = vadd.f32 %v1828, %v1829
          %v1831 = vsel %vm1285, %v1400, 0.0
          %v1832 = vadd.f32 %v1830, %v1831
          %v1833 = vsel %vm1285, %v1401, 0.0
          %v1834 = vadd.f32 %v1832, %v1833
          %v1835 = vsel %vm1285, %v1402, 0.0
          %v1836 = vadd.f32 %v1834, %v1835
          %v1837 = vsel %vm1285, %v1403, 0.0
          %v1838 = vadd.f32 %v1836, %v1837
          %v1839 = vsel %vm1285, %v1404, 0.0
          %v1840 = vadd.f32 %v1838, %v1839
          %v1841 = vsel %vm1285, %v1405, 0.0
          %v1842 = vadd.f32 %v1840, %v1841
          %v1843 = vsel %vm1285, %v1406, 0.0
          %v1844 = vadd.f32 %v1842, %v1843
          %v1845 = vsel %vm1285, %v1407, 0.0
          %v1846 = vadd.f32 %v1844, %v1845
          %v1847 = vsel %vm1285, %v1408, 0.0
          %v1848 = vadd.f32 %v1846, %v1847
          %v1849 = vsel %vm1285, %v1409, 0.0
          %v1850 = vadd.f32 %v1848, %v1849
          %v1851 = vsel %vm1285, %v1410, 0.0
          %v1852 = vadd.f32 %v1850, %v1851
          %v1853 = vsel %vm1285, %v1411, 0.0
          %v1854 = vadd.f32 %v1852, %v1853
          %v1855 = vsel %vm1285, %v1412, 0.0
          %v1856 = vadd.f32 %v1854, %v1855
          %v1857 = vsel %vm1285, %v1413, 0.0
          %v1858 = vadd.f32 %v1856, %v1857
          %v1859 = vsel %vm1285, %v1414, 0.0
          %v1860 = vadd.f32 %v1858, %v1859
          %v1861 = vsel %vm1285, %v1415, 0.0
          %v1862 = vadd.f32 %v1860, %v1861
          %v1863 = vsel %vm1285, %v1416, 0.0
          %v1864 = vadd.f32 %v1862, %v1863
          %v1865 = vrot.slane %v1864, 4
          %v1866 = vadd.f32 %v1864, %v1865
          %v1867 = vrot.slane %v1866, 2
          %v1868 = vadd.f32 %v1866, %v1867
          %v1869 = vrot.slane %v1868, 1
          %v1870 = vadd.f32 %v1868, %v1869
          %v1871 = vmul.f32 %v1353, %v1353
          %v1872 = vmul.f32 %v1354, %v1354
          %v1873 = vmul.f32 %v1355, %v1355
          %v1874 = vmul.f32 %v1356, %v1356
          %v1875 = vmul.f32 %v1357, %v1357
          %v1876 = vmul.f32 %v1358, %v1358
          %v1877 = vmul.f32 %v1359, %v1359
          %v1878 = vmul.f32 %v1360, %v1360
          %v1879 = vmul.f32 %v1361, %v1361
          %v1880 = vmul.f32 %v1362, %v1362
          %v1881 = vmul.f32 %v1363, %v1363
          %v1882 = vmul.f32 %v1364, %v1364
          %v1883 = vmul.f32 %v1365, %v1365
          %v1884 = vmul.f32 %v1366, %v1366
          %v1885 = vmul.f32 %v1367, %v1367
          %v1886 = vmul.f32 %v1368, %v1368
          %v1887 = vmul.f32 %v1369, %v1369
          %v1888 = vmul.f32 %v1370, %v1370
          %v1889 = vmul.f32 %v1371, %v1371
          %v1890 = vmul.f32 %v1372, %v1372
          %v1891 = vmul.f32 %v1373, %v1373
          %v1892 = vmul.f32 %v1374, %v1374
          %v1893 = vmul.f32 %v1375, %v1375
          %v1894 = vmul.f32 %v1376, %v1376
          %v1895 = vmul.f32 %v1377, %v1377
          %v1896 = vmul.f32 %v1378, %v1378
          %v1897 = vmul.f32 %v1379, %v1379
          %v1898 = vmul.f32 %v1380, %v1380
          %v1899 = vmul.f32 %v1381, %v1381
          %v1900 = vmul.f32 %v1382, %v1382
          %v1901 = vmul.f32 %v1383, %v1383
          %v1902 = vmul.f32 %v1384, %v1384
          %v1903 = vmul.f32 %v1385, %v1385
          %v1904 = vmul.f32 %v1386, %v1386
          %v1905 = vmul.f32 %v1387, %v1387
          %v1906 = vmul.f32 %v1388, %v1388
          %v1907 = vmul.f32 %v1389, %v1389
          %v1908 = vmul.f32 %v1390, %v1390
          %v1909 = vmul.f32 %v1391, %v1391
          %v1910 = vmul.f32 %v1392, %v1392
          %v1911 = vmul.f32 %v1393, %v1393
          %v1912 = vmul.f32 %v1394, %v1394
          %v1913 = vmul.f32 %v1395, %v1395
          %v1914 = vmul.f32 %v1396, %v1396
          %v1915 = vmul.f32 %v1397, %v1397
          %v1916 = vmul.f32 %v1398, %v1398
          %v1917 = vmul.f32 %v1399, %v1399
          %v1918 = vmul.f32 %v1400, %v1400
          %v1919 = vmul.f32 %v1401, %v1401
          %v1920 = vmul.f32 %v1402, %v1402
          %v1921 = vmul.f32 %v1403, %v1403
          %v1922 = vmul.f32 %v1404, %v1404
          %v1923 = vmul.f32 %v1405, %v1405
          %v1924 = vmul.f32 %v1406, %v1406
          %v1925 = vmul.f32 %v1407, %v1407
          %v1926 = vmul.f32 %v1408, %v1408
          %v1927 = vmul.f32 %v1409, %v1409
          %v1928 = vmul.f32 %v1410, %v1410
          %v1929 = vmul.f32 %v1411, %v1411
          %v1930 = vmul.f32 %v1412, %v1412
          %v1931 = vmul.f32 %v1413, %v1413
          %v1932 = vmul.f32 %v1414, %v1414
          %v1933 = vmul.f32 %v1415, %v1415
          %v1934 = vmul.f32 %v1416, %v1416
          %v1935 = vsel %vm1285, %v1871, 0.0
          %v1936 = vsel %vm1285, %v1872, 0.0
          %v1937 = vadd.f32 %v1935, %v1936
          %v1938 = vsel %vm1285, %v1873, 0.0
          %v1939 = vadd.f32 %v1937, %v1938
          %v1940 = vsel %vm1285, %v1874, 0.0
          %v1941 = vadd.f32 %v1939, %v1940
          %v1942 = vsel %vm1285, %v1875, 0.0
          %v1943 = vadd.f32 %v1941, %v1942
          %v1944 = vsel %vm1285, %v1876, 0.0
          %v1945 = vadd.f32 %v1943, %v1944
          %v1946 = vsel %vm1285, %v1877, 0.0
          %v1947 = vadd.f32 %v1945, %v1946
          %v1948 = vsel %vm1285, %v1878, 0.0
          %v1949 = vadd.f32 %v1947, %v1948
          %v1950 = vsel %vm1285, %v1879, 0.0
          %v1951 = vadd.f32 %v1949, %v1950
          %v1952 = vsel %vm1285, %v1880, 0.0
          %v1953 = vadd.f32 %v1951, %v1952
          %v1954 = vsel %vm1285, %v1881, 0.0
          %v1955 = vadd.f32 %v1953, %v1954
          %v1956 = vsel %vm1285, %v1882, 0.0
          %v1957 = vadd.f32 %v1955, %v1956
          %v1958 = vsel %vm1285, %v1883, 0.0
          %v1959 = vadd.f32 %v1957, %v1958
          %v1960 = vsel %vm1285, %v1884, 0.0
          %v1961 = vadd.f32 %v1959, %v1960
          %v1962 = vsel %vm1285, %v1885, 0.0
          %v1963 = vadd.f32 %v1961, %v1962
          %v1964 = vsel %vm1285, %v1886, 0.0
          %v1965 = vadd.f32 %v1963, %v1964
          %v1966 = vsel %vm1285, %v1887, 0.0
          %v1967 = vadd.f32 %v1965, %v1966
          %v1968 = vsel %vm1285, %v1888, 0.0
          %v1969 = vadd.f32 %v1967, %v1968
          %v1970 = vsel %vm1285, %v1889, 0.0
          %v1971 = vadd.f32 %v1969, %v1970
          %v1972 = vsel %vm1285, %v1890, 0.0
          %v1973 = vadd.f32 %v1971, %v1972
          %v1974 = vsel %vm1285, %v1891, 0.0
          %v1975 = vadd.f32 %v1973, %v1974
          %v1976 = vsel %vm1285, %v1892, 0.0
          %v1977 = vadd.f32 %v1975, %v1976
          %v1978 = vsel %vm1285, %v1893, 0.0
          %v1979 = vadd.f32 %v1977, %v1978
          %v1980 = vsel %vm1285, %v1894, 0.0
          %v1981 = vadd.f32 %v1979, %v1980
          %v1982 = vsel %vm1285, %v1895, 0.0
          %v1983 = vadd.f32 %v1981, %v1982
          %v1984 = vsel %vm1285, %v1896, 0.0
          %v1985 = vadd.f32 %v1983, %v1984
          %v1986 = vsel %vm1285, %v1897, 0.0
          %v1987 = vadd.f32 %v1985, %v1986
          %v1988 = vsel %vm1285, %v1898, 0.0
          %v1989 = vadd.f32 %v1987, %v1988
          %v1990 = vsel %vm1285, %v1899, 0.0
          %v1991 = vadd.f32 %v1989, %v1990
          %v1992 = vsel %vm1285, %v1900, 0.0
          %v1993 = vadd.f32 %v1991, %v1992
          %v1994 = vsel %vm1285, %v1901, 0.0
          %v1995 = vadd.f32 %v1993, %v1994
          %v1996 = vsel %vm1285, %v1902, 0.0
          %v1997 = vadd.f32 %v1995, %v1996
          %v1998 = vsel %vm1285, %v1903, 0.0
          %v1999 = vadd.f32 %v1997, %v1998
          %v2000 = vsel %vm1285, %v1904, 0.0
          %v2001 = vadd.f32 %v1999, %v2000
          %v2002 = vsel %vm1285, %v1905, 0.0
          %v2003 = vadd.f32 %v2001, %v2002
          %v2004 = vsel %vm1285, %v1906, 0.0
          %v2005 = vadd.f32 %v2003, %v2004
          %v2006 = vsel %vm1285, %v1907, 0.0
          %v2007 = vadd.f32 %v2005, %v2006
          %v2008 = vsel %vm1285, %v1908, 0.0
          %v2009 = vadd.f32 %v2007, %v2008
          %v2010 = vsel %vm1285, %v1909, 0.0
          %v2011 = vadd.f32 %v2009, %v2010
          %v2012 = vsel %vm1285, %v1910, 0.0
          %v2013 = vadd.f32 %v2011, %v2012
          %v2014 = vsel %vm1285, %v1911, 0.0
          %v2015 = vadd.f32 %v2013, %v2014
          %v2016 = vsel %vm1285, %v1912, 0.0
          %v2017 = vadd.f32 %v2015, %v2016
          %v2018 = vsel %vm1285, %v1913, 0.0
          %v2019 = vadd.f32 %v2017, %v2018
          %v2020 = vsel %vm1285, %v1914, 0.0
          %v2021 = vadd.f32 %v2019, %v2020
          %v2022 = vsel %vm1285, %v1915, 0.0
          %v2023 = vadd.f32 %v2021, %v2022
          %v2024 = vsel %vm1285, %v1916, 0.0
          %v2025 = vadd.f32 %v2023, %v2024
          %v2026 = vsel %vm1285, %v1917, 0.0
          %v2027 = vadd.f32 %v2025, %v2026
          %v2028 = vsel %vm1285, %v1918, 0.0
          %v2029 = vadd.f32 %v2027, %v2028
          %v2030 = vsel %vm1285, %v1919, 0.0
          %v2031 = vadd.f32 %v2029, %v2030
          %v2032 = vsel %vm1285, %v1920, 0.0
          %v2033 = vadd.f32 %v2031, %v2032
          %v2034 = vsel %vm1285, %v1921, 0.0
          %v2035 = vadd.f32 %v2033, %v2034
          %v2036 = vsel %vm1285, %v1922, 0.0
          %v2037 = vadd.f32 %v2035, %v2036
          %v2038 = vsel %vm1285, %v1923, 0.0
          %v2039 = vadd.f32 %v2037, %v2038
          %v2040 = vsel %vm1285, %v1924, 0.0
          %v2041 = vadd.f32 %v2039, %v2040
          %v2042 = vsel %vm1285, %v1925, 0.0
          %v2043 = vadd.f32 %v2041, %v2042
          %v2044 = vsel %vm1285, %v1926, 0.0
          %v2045 = vadd.f32 %v2043, %v2044
          %v2046 = vsel %vm1285, %v1927, 0.0
          %v2047 = vadd.f32 %v2045, %v2046
          %v2048 = vsel %vm1285, %v1928, 0.0
          %v2049 = vadd.f32 %v2047, %v2048
          %v2050 = vsel %vm1285, %v1929, 0.0
          %v2051 = vadd.f32 %v2049, %v2050
          %v2052 = vsel %vm1285, %v1930, 0.0
          %v2053 = vadd.f32 %v2051, %v2052
          %v2054 = vsel %vm1285, %v1931, 0.0
          %v2055 = vadd.f32 %v2053, %v2054
          %v2056 = vsel %vm1285, %v1932, 0.0
          %v2057 = vadd.f32 %v2055, %v2056
          %v2058 = vsel %vm1285, %v1933, 0.0
          %v2059 = vadd.f32 %v2057, %v2058
          %v2060 = vsel %vm1285, %v1934, 0.0
          %v2061 = vadd.f32 %v2059, %v2060
          %v2062 = vrot.slane %v2061, 4
          %v2063 = vadd.f32 %v2061, %v2062
          %v2064 = vrot.slane %v2063, 2
          %v2065 = vadd.f32 %v2063, %v2064
          %v2066 = vrot.slane %v2065, 1
          %v2067 = vadd.f32 %v2065, %v2066
          %vm2068 = vcmask 1043456
          %v2069 = vsel %vm2068, %v1870, %v2067
          %2070 = vst.msk [vmem:[%s235] sm:$0xff] %vm1285, %v2069
        $region36: #{tpu_custom_call.1} parent=27 // pred_fallthru
          _
        %s2071 = smul.u32 64, %s23
        %p2072 = scmp.lt.s32.totalorder %s2071, 255
        %s2073 = scalar_select %p2072, %s2071, 255
        %p2074 = scmp.lt.s32.totalorder %s24, 0
        %s2075 = scalar_select %p2074, %s24, 0
        %s2076 = sadd.s32 %s2075, %s2073
        %s2077 = smul.addr %s2076, 4
        %s2078 = scalar_lea.vmem %s2, %s2077
        %s2079 = sand.u32 %s131, 1
        %s2080 = scalar_lea.sflag [#allocation4], %s2079
        %s2081 = sand.u32 %s131, 1
        %s2082 = smul.addr %s2081, 8
        %s2083 = scalar_lea.vmem [#allocation3], %s2082
        // Predicated region
        $region37: #{tpu_custom_call.1} parent=27 // pred_check
          %p2084 = pneg %p113
        $region38: #{tpu_custom_call.1} parent=27 // pred_check_branch
          %2086 = sbr.rel (%p2084) target = $region40
        $region39: #{tpu_custom_call.1} parent=27 // pred_region
          %s2087 = smul.u32 64, %s23
        $region40: #{tpu_custom_call.1} parent=27 // pred_fallthru
          _
        // Predicated region
        $region41: #{tpu_custom_call.1} parent=27 // pred_check
          %p2088 = pneg %p141
        $region42: #{tpu_custom_call.1} parent=27 // pred_check_branch
          %2090 = sbr.rel (%p2088) target = $region44
        $region43: #{tpu_custom_call.1} parent=27 // pred_region
          %s2092 = ssub.s32 128, 128
          %2093 = vsyncadd %s2080, %s2092
          %s2094 = sadd.s32 %s24, %s23
          %s2095 = smul.addr %s2094, 128
          %s2096 = scalar_lea.hbm %s3, %s2095
          %s2098 = sshll.u32 %s2083, 4
          %s2099 = int_to_ptr.vmem [resolvable:$true] %s2098
          %2101 = dma.vmem_to_hbm [thread:$0]  %s2099, 128, %s2096, %s2080
        $region44: #{tpu_custom_call.1} parent=27 // pred_fallthru
          _
      $region28: #{tpu_custom_call.1} parent=5 // pred_fallthru
        _
      %p2102 = scmp.le.s32.totalorder 2, %s13
      // Predicated region
      $region45: #{tpu_custom_call.1} parent=5 // pred_check
        %p2103 = pneg %p2102
      $region46: #{tpu_custom_call.1} parent=5 // pred_check_branch
        %2105 = sbr.rel (%p2103) target = $region48
      $region47: #{tpu_custom_call.1} parent=5 // pred_region
        %s2106 = ssub.s32 %s13, 2
        // Predicated region
        $region49: #{tpu_custom_call.1} parent=47 // pred_check
          %p2107 = pneg %p119
        $region50: #{tpu_custom_call.1} parent=47 // pred_check_branch
          %2109 = sbr.rel (%p2107) target = $region52
        $region51: #{tpu_custom_call.1} parent=47 // pred_region
          %s2110 = smul.u32 64, %s26
          %p2111 = scmp.lt.s32.totalorder %s2110, 255
          %s2112 = scalar_select %p2111, %s2110, 255
          %p2113 = scmp.lt.s32.totalorder %s27, 0
          %s2114 = scalar_select %p2113, %s27, 0
          %s2115 = sadd.s32 %s2114, %s2112
          %s2116 = smul.addr %s2115, 4
          %s2117 = scalar_lea.vmem %s2, %s2116
        $region52: #{tpu_custom_call.1} parent=47 // pred_fallthru
          _
        // Predicated region
        $region53: #{tpu_custom_call.1} parent=47 // pred_check
          %p2118 = pneg %p147
        $region54: #{tpu_custom_call.1} parent=47 // pred_check_branch
          %2120 = sbr.rel (%p2118) target = $region56
        $region55: #{tpu_custom_call.1} parent=47 // pred_region
          %s2121 = sand.u32 %s132, 1
          %s2122 = scalar_lea.sflag [#allocation4], %s2121
          %s2123 = sand.u32 %s132, 1
          %s2124 = smul.addr %s2123, 8
          %s2125 = scalar_lea.vmem [#allocation3], %s2124
          %2126 = dma.done %s2122, 128
        $region56: #{tpu_custom_call.1} parent=47 // pred_fallthru
          _
      $region48: #{tpu_custom_call.1} parent=5 // pred_fallthru
        _
    $region6: #{tpu_custom_call.1} parent=1 // loop_footer
      %s17 = sadd.s32 1, %s13
    $region7: #{tpu_custom_call.1} parent=1 // loop_footer_branch
      %12 = sbr.rel target = $region3
    $region8: #{tpu_custom_call.1} parent=1 // loop_exit
      _
    %2127 = vsyncpa [#allocation4], 1
    %s2128 = scalar_lea.sflag [#allocation4], 1
    %2129 = vsyncpa %s2128, 1

</llo_original>
